<compile_context>
chip_gen: v6e
topology: v6e:2x2x1
jax: 0.10.0
libtpu: 0.0.40
codegen_flags: <defaults>
</compile_context>

<pallas_src>
import functools

import jax
import jax.numpy as jnp
from jax import lax
from jax.experimental import pallas as pl
from jax.experimental.pallas import tpu as pltpu


def _round_up(x, m):
    return (x + m - 1) // m * m


# ------------------------------ Pallas kernels --------------------------------

def _conv_bn_act_kernel(p_ref, w_ref, scale_ref, bias_ref, *rest, act,
                        has_residual):
    """Fused conv step: (patches @ W) * scale + bias [+ residual] [ReLU].

    p_ref     : [tile_p, K*K*Cin]  bf16  (im2col patches, rows = output pixels)
    w_ref     : [K*K*Cin, Cout]    bf16
    scale_ref : [1, Cout]          f32   (folded BatchNorm scale)
    bias_ref  : [1, Cout]          f32   (folded BatchNorm bias)
    res_ref   : [tile_p, Cout]     f32   (optional residual)
    o_ref     : [tile_p, Cout]     f32
    """
    if has_residual:
        res_ref, o_ref = rest
    else:
        (o_ref,) = rest
    # Single lane-dense MXU matmul, f32 accumulation.
    acc = jnp.dot(p_ref[...], w_ref[...], preferred_element_type=jnp.float32)
    y = acc * scale_ref[...] + bias_ref[...]
    if has_residual:
        y = y + res_ref[...]
    if act == "relu":
        y = jnp.maximum(y, 0.0)
    o_ref[...] = y


def _maxpool_kernel(t_ref, o_ref):
    # t_ref: [9, tile_p, C] pre-gathered window taps; reduce max over taps.
    m = t_ref[0]
    for i in range(1, t_ref.shape[0]):
        m = jnp.maximum(m, t_ref[i])
    o_ref[...] = m


def _row_tiling(p, sublane_mult):
    tile_p = 256 if p > 256 else _round_up(max(p, sublane_mult), sublane_mult)
    return tile_p, _round_up(p, tile_p)


def fused_conv_bn_act(patches, w_flat, scale, bias, act, residual=None):
    """patches [P, Kc] f32, w_flat [Kc, Cout] f32 -> [P, Cout] f32."""
    p_rows, kc = patches.shape
    cout = w_flat.shape[1]
    tile_p, p_pad = _row_tiling(p_rows, 16)   # 16 = bf16 sublane tile

    patches_p = jnp.pad(patches, ((0, p_pad - p_rows), (0, 0)))
    args = [patches_p.astype(jnp.bfloat16),
            w_flat.astype(jnp.bfloat16),
            scale.reshape(1, cout).astype(jnp.float32),
            bias.reshape(1, cout).astype(jnp.float32)]
    in_specs = [
        pl.BlockSpec((tile_p, kc), lambda i: (i, 0)),
        pl.BlockSpec((kc, cout), lambda i: (0, 0)),
        pl.BlockSpec((1, cout), lambda i: (0, 0)),
        pl.BlockSpec((1, cout), lambda i: (0, 0)),
    ]
    has_residual = residual is not None
    if has_residual:
        res_p = jnp.pad(residual.astype(jnp.float32),
                        ((0, p_pad - p_rows), (0, 0)))
        args.append(res_p)
        in_specs.append(pl.BlockSpec((tile_p, cout), lambda i: (i, 0)))

    kernel = functools.partial(_conv_bn_act_kernel, act=act,
                               has_residual=has_residual)
    out = pl.pallas_call(
        kernel,
        out_shape=jax.ShapeDtypeStruct((p_pad, cout), jnp.float32),
        grid=(p_pad // tile_p,),
        in_specs=in_specs,
        out_specs=pl.BlockSpec((tile_p, cout), lambda i: (i, 0)),
        compiler_params=pltpu.CompilerParams(
            dimension_semantics=("parallel",)),
    )(*args)
    return out[:p_rows]


def maxpool_taps(taps):
    """taps [9, P, C] f32 -> [P, C] f32 (max over the 9 window taps)."""
    _, p_rows, c = taps.shape
    tile_p, p_pad = _row_tiling(p_rows, 8)
    taps_p = jnp.pad(taps, ((0, 0), (0, p_pad - p_rows), (0, 0)))
    out = pl.pallas_call(
        _maxpool_kernel,
        out_shape=jax.ShapeDtypeStruct((p_pad, c), jnp.float32),
        grid=(p_pad // tile_p,),
        in_specs=[pl.BlockSpec((9, tile_p, c), lambda i: (0, i, 0))],
        out_specs=pl.BlockSpec((tile_p, c), lambda i: (i, 0)),
        compiler_params=pltpu.CompilerParams(
            dimension_semantics=("parallel",)),
    )(taps_p)
    return out[:p_rows]


# ------------------- JAX-side layout plumbing (im2col etc.) -------------------

def _extract_patches(x, k, stride, pad, fill=0.0):
    """x [N,H,W,C] -> (list of k*k taps each [N*Ho*Wo, C], (N, Ho, Wo))."""
    n, h, w, c = x.shape
    ho = (h + 2 * pad - k) // stride + 1
    wo = (w + 2 * pad - k) // stride + 1
    xp = jnp.pad(x, ((0, 0), (pad, pad), (pad, pad), (0, 0)),
                 constant_values=fill)
    cols = []
    for kh in range(k):
        for kw in range(k):
            tap = lax.slice(
                xp, (0, kh, kw, 0),
                (n, kh + (ho - 1) * stride + 1, kw + (wo - 1) * stride + 1, c),
                (1, stride, stride, 1))
            cols.append(tap.reshape(n * ho * wo, c))
    return cols, (n, ho, wo)


def conv_bn_act(x, w_hwio, scale, bias, *, stride, pad, act, residual=None):
    k, _, cin, cout = w_hwio.shape
    cols, (n, ho, wo) = _extract_patches(x, k, stride, pad)
    patches = cols[0] if len(cols) == 1 else jnp.concatenate(cols, axis=1)
    w_flat = w_hwio.reshape(k * k * cin, cout)
    res_flat = None if residual is None else residual.reshape(n * ho * wo, cout)
    out = fused_conv_bn_act(patches, w_flat, scale, bias, act, res_flat)
    return out.reshape(n, ho, wo, cout)


def maxpool_3x3_s2_p1(x):
    cols, (n, ho, wo) = _extract_patches(x, 3, 2, 1, fill=-1e30)
    taps = jnp.stack(cols, axis=0)                    # [9, P, C]
    return maxpool_taps(taps).reshape(n, ho, wo, x.shape[-1])


# ----------------------------- ResNetEncoder ----------------------------------

def _basic_block(bp, x):
    cin, cout = x.shape[-1], bp["w1"].shape[-1]
    down = 2 if cin != cout else 1
    if cin != cout:                                   # 1x1 projection shortcut
        residual = conv_bn_act(x, bp["wsc"], bp["bnsc"]["scale"],
                               bp["bnsc"]["bias"], stride=down, pad=0,
                               act="none")
    else:
        residual = x
    h = conv_bn_act(x, bp["w1"], bp["bn1"]["scale"], bp["bn1"]["bias"],
                    stride=down, pad=1, act="relu")
    # second conv fuses folded BN + residual add + final ReLU in its epilogue
    return conv_bn_act(h, bp["w2"], bp["bn2"]["scale"], bp["bn2"]["bias"],
                       stride=1, pad=1, act="relu", residual=residual)


@functools.partial(jax.jit, static_argnames=("stage",))
def resnet_encoder_forward(params, x_nchw, *, stage):
    x = jnp.transpose(x_nchw, (0, 2, 3, 1))           # NCHW -> NHWC
    if stage == 0:
        x = conv_bn_act(x, params["gate_w"], params["gate_bn"]["scale"],
                        params["gate_bn"]["bias"], stride=2, pad=3, act="relu")
        x = maxpool_3x3_s2_p1(x)
    for bp in params["blocks"]:
        x = _basic_block(bp, x)
    return jnp.transpose(x, (0, 3, 1, 2))             # NHWC -> NCHW


# ------------------------------ parameters ------------------------------------

def _init_conv(key, k, cin, cout):
    std = (2.0 / (k * k * cin)) ** 0.5
    return std * jax.random.normal(key, (k, k, cin, cout), jnp.float32)


def _init_bn(key, c, eps=1e-5):
    k1, k2, k3, k4 = jax.random.split(key, 4)
    gamma = jax.random.uniform(k1, (c,), jnp.float32, 0.8, 1.2)
    beta = 0.1 * jax.random.normal(k2, (c,), jnp.float32)
    mean = 0.1 * jax.random.normal(k3, (c,), jnp.float32)
    var = jax.random.uniform(k4, (c,), jnp.float32, 0.5, 1.5)
    scale = gamma / jnp.sqrt(var + eps)               # inference-mode fold
    return {"scale": scale, "bias": beta - mean * scale}


def _init_basic_block(key, cin, cout):
    ks = jax.random.split(key, 6)
    bp = {"w1": _init_conv(ks[0], 3, cin, cout), "bn1": _init_bn(ks[1], cout),
          "w2": _init_conv(ks[2], 3, cout, cout), "bn2": _init_bn(ks[3], cout)}
    if cin != cout:
        bp["wsc"] = _init_conv(ks[4], 1, cin, cout)
        bp["bnsc"] = _init_bn(ks[5], cout)
    return bp


def init_resnet_encoder(key, stage, in_channels=3,
                        blocks_sizes=(64, 128, 256, 512), depths=(2, 2, 2, 2)):
    kg, kb, kbl = jax.random.split(key, 3)
    params = {}
    if stage == 0:
        params["gate_w"] = _init_conv(kg, 7, in_channels, blocks_sizes[0])
        params["gate_bn"] = _init_bn(kb, blocks_sizes[0])
        cin = cout = blocks_sizes[0]
        n = depths[0]
    else:
        cin, cout = blocks_sizes[stage - 1], blocks_sizes[stage]
        n = depths[stage]
    bkeys = jax.random.split(kbl, n)
    blocks, c = [], cin
    for i in range(n):
        blocks.append(_init_basic_block(bkeys[i], c, cout))
        c = cout
    params["blocks"] = blocks
    return params


# --------------------------- pure-JAX reference --------------------------------

def _ref_conv_bn_act(x, w, scale, bias, stride, pad, act, residual=None):
    y = lax.conv_general_dilated(
        x.astype(jnp.bfloat16), w.astype(jnp.bfloat16),
        window_strides=(stride, stride), padding=((pad, pad), (pad, pad)),
        dimension_numbers=("NHWC", "HWIO", "NHWC"),
        preferred_element_type=jnp.float32)
    y = y * scale.reshape(1, 1, 1, -1) + bias.reshape(1, 1, 1, -1)
    if residual is not None:
        y = y + residual
    if act == "relu":
        y = jnp.maximum(y, 0.0)
    return y


def _ref_maxpool(x):
    return lax.reduce_window(x, -jnp.inf, lax.max, (1, 3, 3, 1), (1, 2, 2, 1),
                             ((0, 0), (1, 1), (1, 1), (0, 0)))


def ref_encoder_forward(params, x_nchw, stage):
    x = jnp.transpose(x_nchw, (0, 2, 3, 1))
    if stage == 0:
        x = _ref_conv_bn_act(x, params["gate_w"], params["gate_bn"]["scale"],
                             params["gate_bn"]["bias"], 2, 3, "relu")
        x = _ref_maxpool(x)
    for bp in params["blocks"]:
        cin, cout = x.shape[-1], bp["w1"].shape[-1]
        down = 2 if cin != cout else 1
        if cin != cout:
            residual = _ref_conv_bn_act(x, bp["wsc"], bp["bnsc"]["scale"],
                                        bp["bnsc"]["bias"], down, 0, "none")
        else:
            residual = x
        h = _ref_conv_bn_act(x, bp["w1"], bp["bn1"]["scale"],
                             bp["bn1"]["bias"], down, 1, "relu")
        x = _ref_conv_bn_act(h, bp["w2"], bp["bn2"]["scale"],
                             bp["bn2"]["bias"], 1, 1, "relu",
                             residual=residual)
    return jnp.transpose(x, (0, 3, 1, 2))


# ---------------------------------- main ---------------------------------------

if __name__ == "__main__":
    key = jax.random.PRNGKey(0)
    kx, k0, k1 = jax.random.split(key, 3)

    # x: [batch=2, in_channels=3, H=16, W=16], NCHW like the PyTorch module.
    x = jax.random.normal(kx, (2, 3, 16, 16), jnp.float32)

    p0 = init_resnet_encoder(k0, stage=0)  # gate + 2x BasicBlock(64 -> 64)
    p1 = init_resnet_encoder(k1, stage=1)  # 2x BasicBlock, 64 -> 128 (stride-2 + shortcut)

    y0 = jax.block_until_ready(resnet_encoder_forward(p0, x, stage=0))
    y1 = jax.block_until_ready(resnet_encoder_forward(p1, y0, stage=1))

    r0 = ref_encoder_forward(p0, x, 0)
    r1 = ref_encoder_forward(p1, y0, 1)

    assert y0.shape == (2, 64, 4, 4), y0.shape
    assert y1.shape == (2, 128, 2, 2), y1.shape
    err0 = float(jnp.max(jnp.abs(y0 - r0)))
    err1 = float(jnp.max(jnp.abs(y1 - r1)))
    assert jnp.allclose(y0, r0, atol=2e-2, rtol=2e-2), ("stage0 mismatch", err0)
    assert jnp.allclose(y1, r1, atol=2e-2, rtol=2e-2), ("stage1 mismatch", err1)
    print("KERNEL_OK")
</pallas_src>

<mosaic_0001>
module attributes {stable_mosaic.version = 11 : i64} {
  func.func @_conv_bn_act_kernel(%arg0: i32, %arg1: memref<128x147xbf16, #tpu.memory_space<vmem>>, %arg2: memref<147x64xbf16, #tpu.memory_space<vmem>>, %arg3: memref<1x64xf32, #tpu.memory_space<vmem>>, %arg4: memref<1x64xf32, #tpu.memory_space<vmem>>, %arg5: memref<128x64xf32, #tpu.memory_space<vmem>>) attributes {dimension_semantics = [#tpu.dimension_semantics<parallel>], iteration_bounds = array<i64: 1>, scalar_prefetch = 0 : i64, scratch_operands = 0 : i64, tpu.core_type = #tpu.core_type<tc>, window_params = [{transform_indices = @transform_0, window_bounds = array<i64: 128, 147>}, {pipeline_mode = #tpu.pipeline_mode<synchronous>, transform_indices = @transform_1, window_bounds = array<i64: 147, 64>}, {pipeline_mode = #tpu.pipeline_mode<synchronous>, transform_indices = @transform_2, window_bounds = array<i64: 1, 64>}, {pipeline_mode = #tpu.pipeline_mode<synchronous>, transform_indices = @transform_3, window_bounds = array<i64: 1, 64>}, {transform_indices = @transform_4, window_bounds = array<i64: 128, 64>}]} {
    %c0 = arith.constant 0 : index
    %c0_0 = arith.constant 0 : index
    %0 = vector.load %arg1[%c0, %c0_0] : memref<128x147xbf16, #tpu.memory_space<vmem>>, vector<128x147xbf16>
    %c0_1 = arith.constant 0 : index
    %c0_2 = arith.constant 0 : index
    %1 = vector.load %arg2[%c0_1, %c0_2] : memref<147x64xbf16, #tpu.memory_space<vmem>>, vector<147x64xbf16>
    %cst = arith.constant dense<0.000000e+00> : vector<128x64xf32>
    %2 = tpu.matmul %0, %1, %cst {dimension_numbers = #tpu.dot_dimension_numbers<[1], [0], [0], [1], [0, 0, 1, 1], [], []>} : vector<128x147xbf16>, vector<147x64xbf16>, vector<128x64xf32> -> vector<128x64xf32>
    %c0_3 = arith.constant 0 : index
    %c0_4 = arith.constant 0 : index
    %3 = vector.load %arg3[%c0_3, %c0_4] : memref<1x64xf32, #tpu.memory_space<vmem>>, vector<1x64xf32>
    %4 = vector.broadcast %3 : vector<1x64xf32> to vector<128x64xf32>
    %5 = arith.mulf %2, %4 : vector<128x64xf32>
    %c0_5 = arith.constant 0 : index
    %c0_6 = arith.constant 0 : index
    %6 = vector.load %arg4[%c0_5, %c0_6] : memref<1x64xf32, #tpu.memory_space<vmem>>, vector<1x64xf32>
    %7 = vector.broadcast %6 : vector<1x64xf32> to vector<128x64xf32>
    %8 = arith.addf %5, %7 : vector<128x64xf32>
    %cst_7 = arith.constant 0.000000e+00 : f32
    %9 = vector.broadcast %cst_7 : f32 to vector<128x64xf32>
    %10 = arith.maximumf %8, %9 : vector<128x64xf32>
    %c0_8 = arith.constant 0 : index
    %c0_9 = arith.constant 0 : index
    %11 = vector.load %arg5[%c0_8, %c0_9] : memref<128x64xf32, #tpu.memory_space<vmem>>, vector<128x64xf32>
    tpu.vector_store %arg5[%c0_8, %c0_9], %10 {strides = array<i32>} : memref<128x64xf32, #tpu.memory_space<vmem>>, vector<128x64xf32>,
    return
  }
  func.func @transform_0(%arg0: i32) -> (i32, i32) {
    %c0_i32 = arith.constant 0 : i32
    %c0_i32_0 = arith.constant 0 : i32
    return %arg0, %c0_i32 : i32, i32
  }
  func.func @transform_1(%arg0: i32) -> (i32, i32) {
    %c0_i32 = arith.constant 0 : i32
    %c0_i32_0 = arith.constant 0 : i32
    %c0_i32_1 = arith.constant 0 : i32
    return %c0_i32, %c0_i32_0 : i32, i32
  }
  func.func @transform_2(%arg0: i32) -> (i32, i32) {
    %c0_i32 = arith.constant 0 : i32
    %c0_i32_0 = arith.constant 0 : i32
    %c0_i32_1 = arith.constant 0 : i32
    return %c0_i32, %c0_i32_0 : i32, i32
  }
  func.func @transform_3(%arg0: i32) -> (i32, i32) {
    %c0_i32 = arith.constant 0 : i32
    %c0_i32_0 = arith.constant 0 : i32
    %c0_i32_1 = arith.constant 0 : i32
    return %c0_i32, %c0_i32_0 : i32, i32
  }
  func.func @transform_4(%arg0: i32) -> (i32, i32) {
    %c0_i32 = arith.constant 0 : i32
    %c0_i32_0 = arith.constant 0 : i32
    return %arg0, %c0_i32 : i32, i32
  }
}

module attributes {stable_mosaic.version = 11 : i64} {
  func.func @_maxpool_kernel(%arg0: i32, %arg1: memref<9x32x64xf32, #tpu.memory_space<vmem>>, %arg2: memref<32x64xf32, #tpu.memory_space<vmem>>) attributes {dimension_semantics = [#tpu.dimension_semantics<parallel>], iteration_bounds = array<i64: 1>, scalar_prefetch = 0 : i64, scratch_operands = 0 : i64, tpu.core_type = #tpu.core_type<tc>, window_params = [{transform_indices = @transform_0, window_bounds = array<i64: 9, 32, 64>}, {transform_indices = @transform_1, window_bounds = array<i64: 32, 64>}]} {
    %c0 = arith.constant 0 : index
    %c0_0 = arith.constant 0 : index
    %c0_1 = arith.constant 0 : index
    %0 = vector.load %arg1[%c0, %c0_0, %c0_1] : memref<9x32x64xf32, #tpu.memory_space<vmem>>, vector<1x32x64xf32>
    %1 = vector.shape_cast %0 : vector<1x32x64xf32> to vector<32x64xf32>
    %c1 = arith.constant 1 : index
    %c0_2 = arith.constant 0 : index
    %c0_3 = arith.constant 0 : index
    %2 = vector.load %arg1[%c1, %c0_2, %c0_3] : memref<9x32x64xf32, #tpu.memory_space<vmem>>, vector<1x32x64xf32>
    %3 = vector.shape_cast %2 : vector<1x32x64xf32> to vector<32x64xf32>
    %4 = arith.maximumf %1, %3 : vector<32x64xf32>
    %c2 = arith.constant 2 : index
    %c0_4 = arith.constant 0 : index
    %c0_5 = arith.constant 0 : index
    %5 = vector.load %arg1[%c2, %c0_4, %c0_5] : memref<9x32x64xf32, #tpu.memory_space<vmem>>, vector<1x32x64xf32>
    %6 = vector.shape_cast %5 : vector<1x32x64xf32> to vector<32x64xf32>
    %7 = arith.maximumf %4, %6 : vector<32x64xf32>
    %c3 = arith.constant 3 : index
    %c0_6 = arith.constant 0 : index
    %c0_7 = arith.constant 0 : index
    %8 = vector.load %arg1[%c3, %c0_6, %c0_7] : memref<9x32x64xf32, #tpu.memory_space<vmem>>, vector<1x32x64xf32>
    %9 = vector.shape_cast %8 : vector<1x32x64xf32> to vector<32x64xf32>
    %10 = arith.maximumf %7, %9 : vector<32x64xf32>
    %c4 = arith.constant 4 : index
    %c0_8 = arith.constant 0 : index
    %c0_9 = arith.constant 0 : index
    %11 = vector.load %arg1[%c4, %c0_8, %c0_9] : memref<9x32x64xf32, #tpu.memory_space<vmem>>, vector<1x32x64xf32>
    %12 = vector.shape_cast %11 : vector<1x32x64xf32> to vector<32x64xf32>
    %13 = arith.maximumf %10, %12 : vector<32x64xf32>
    %c5 = arith.constant 5 : index
    %c0_10 = arith.constant 0 : index
    %c0_11 = arith.constant 0 : index
    %14 = vector.load %arg1[%c5, %c0_10, %c0_11] : memref<9x32x64xf32, #tpu.memory_space<vmem>>, vector<1x32x64xf32>
    %15 = vector.shape_cast %14 : vector<1x32x64xf32> to vector<32x64xf32>
    %16 = arith.maximumf %13, %15 : vector<32x64xf32>
    %c6 = arith.constant 6 : index
    %c0_12 = arith.constant 0 : index
    %c0_13 = arith.constant 0 : index
    %17 = vector.load %arg1[%c6, %c0_12, %c0_13] : memref<9x32x64xf32, #tpu.memory_space<vmem>>, vector<1x32x64xf32>
    %18 = vector.shape_cast %17 : vector<1x32x64xf32> to vector<32x64xf32>
    %19 = arith.maximumf %16, %18 : vector<32x64xf32>
    %c7 = arith.constant 7 : index
    %c0_14 = arith.constant 0 : index
    %c0_15 = arith.constant 0 : index
    %20 = vector.load %arg1[%c7, %c0_14, %c0_15] : memref<9x32x64xf32, #tpu.memory_space<vmem>>, vector<1x32x64xf32>
    %21 = vector.shape_cast %20 : vector<1x32x64xf32> to vector<32x64xf32>
    %22 = arith.maximumf %19, %21 : vector<32x64xf32>
    %c8 = arith.constant 8 : index
    %c0_16 = arith.constant 0 : index
    %c0_17 = arith.constant 0 : index
    %23 = vector.load %arg1[%c8, %c0_16, %c0_17] : memref<9x32x64xf32, #tpu.memory_space<vmem>>, vector<1x32x64xf32>
    %24 = vector.shape_cast %23 : vector<1x32x64xf32> to vector<32x64xf32>
    %25 = arith.maximumf %22, %24 : vector<32x64xf32>
    %c0_18 = arith.constant 0 : index
    %c0_19 = arith.constant 0 : index
    %26 = vector.load %arg2[%c0_18, %c0_19] : memref<32x64xf32, #tpu.memory_space<vmem>>, vector<32x64xf32>
    tpu.vector_store %arg2[%c0_18, %c0_19], %25 {strides = array<i32>} : memref<32x64xf32, #tpu.memory_space<vmem>>, vector<32x64xf32>,
    return
  }
  func.func @transform_0(%arg0: i32) -> (i32, i32, i32) {
    %c0_i32 = arith.constant 0 : i32
    %c0_i32_0 = arith.constant 0 : i32
    %c0_i32_1 = arith.constant 0 : i32
    return %c0_i32, %arg0, %c0_i32_0 : i32, i32, i32
  }
  func.func @transform_1(%arg0: i32) -> (i32, i32) {
    %c0_i32 = arith.constant 0 : i32
    %c0_i32_0 = arith.constant 0 : i32
    return %arg0, %c0_i32 : i32, i32
  }
}

module attributes {stable_mosaic.version = 11 : i64} {
  func.func @_conv_bn_act_kernel(%arg0: i32, %arg1: memref<32x576xbf16, #tpu.memory_space<vmem>>, %arg2: memref<576x64xbf16, #tpu.memory_space<vmem>>, %arg3: memref<1x64xf32, #tpu.memory_space<vmem>>, %arg4: memref<1x64xf32, #tpu.memory_space<vmem>>, %arg5: memref<32x64xf32, #tpu.memory_space<vmem>>) attributes {dimension_semantics = [#tpu.dimension_semantics<parallel>], iteration_bounds = array<i64: 1>, scalar_prefetch = 0 : i64, scratch_operands = 0 : i64, tpu.core_type = #tpu.core_type<tc>, window_params = [{transform_indices = @transform_0, window_bounds = array<i64: 32, 576>}, {pipeline_mode = #tpu.pipeline_mode<synchronous>, transform_indices = @transform_1, window_bounds = array<i64: 576, 64>}, {pipeline_mode = #tpu.pipeline_mode<synchronous>, transform_indices = @transform_2, window_bounds = array<i64: 1, 64>}, {pipeline_mode = #tpu.pipeline_mode<synchronous>, transform_indices = @transform_3, window_bounds = array<i64: 1, 64>}, {transform_indices = @transform_4, window_bounds = array<i64: 32, 64>}]} {
    %c0 = arith.constant 0 : index
    %c0_0 = arith.constant 0 : index
    %0 = vector.load %arg1[%c0, %c0_0] : memref<32x576xbf16, #tpu.memory_space<vmem>>, vector<32x576xbf16>
    %c0_1 = arith.constant 0 : index
    %c0_2 = arith.constant 0 : index
    %1 = vector.load %arg2[%c0_1, %c0_2] : memref<576x64xbf16, #tpu.memory_space<vmem>>, vector<576x64xbf16>
    %cst = arith.constant dense<0.000000e+00> : vector<32x64xf32>
    %2 = tpu.matmul %0, %1, %cst {dimension_numbers = #tpu.dot_dimension_numbers<[1], [0], [0], [1], [0, 0, 1, 1], [], []>} : vector<32x576xbf16>, vector<576x64xbf16>, vector<32x64xf32> -> vector<32x64xf32>
    %c0_3 = arith.constant 0 : index
    %c0_4 = arith.constant 0 : index
    %3 = vector.load %arg3[%c0_3, %c0_4] : memref<1x64xf32, #tpu.memory_space<vmem>>, vector<1x64xf32>
    %4 = vector.broadcast %3 : vector<1x64xf32> to vector<32x64xf32>
    %5 = arith.mulf %2, %4 : vector<32x64xf32>
    %c0_5 = arith.constant 0 : index
    %c0_6 = arith.constant 0 : index
    %6 = vector.load %arg4[%c0_5, %c0_6] : memref<1x64xf32, #tpu.memory_space<vmem>>, vector<1x64xf32>
    %7 = vector.broadcast %6 : vector<1x64xf32> to vector<32x64xf32>
    %8 = arith.addf %5, %7 : vector<32x64xf32>
    %cst_7 = arith.constant 0.000000e+00 : f32
    %9 = vector.broadcast %cst_7 : f32 to vector<32x64xf32>
    %10 = arith.maximumf %8, %9 : vector<32x64xf32>
    %c0_8 = arith.constant 0 : index
    %c0_9 = arith.constant 0 : index
    %11 = vector.load %arg5[%c0_8, %c0_9] : memref<32x64xf32, #tpu.memory_space<vmem>>, vector<32x64xf32>
    tpu.vector_store %arg5[%c0_8, %c0_9], %10 {strides = array<i32>} : memref<32x64xf32, #tpu.memory_space<vmem>>, vector<32x64xf32>,
    return
  }
  func.func @transform_0(%arg0: i32) -> (i32, i32) {
    %c0_i32 = arith.constant 0 : i32
    %c0_i32_0 = arith.constant 0 : i32
    return %arg0, %c0_i32 : i32, i32
  }
  func.func @transform_1(%arg0: i32) -> (i32, i32) {
    %c0_i32 = arith.constant 0 : i32
    %c0_i32_0 = arith.constant 0 : i32
    %c0_i32_1 = arith.constant 0 : i32
    return %c0_i32, %c0_i32_0 : i32, i32
  }
  func.func @transform_2(%arg0: i32) -> (i32, i32) {
    %c0_i32 = arith.constant 0 : i32
    %c0_i32_0 = arith.constant 0 : i32
    %c0_i32_1 = arith.constant 0 : i32
    return %c0_i32, %c0_i32_0 : i32, i32
  }
  func.func @transform_3(%arg0: i32) -> (i32, i32) {
    %c0_i32 = arith.constant 0 : i32
    %c0_i32_0 = arith.constant 0 : i32
    %c0_i32_1 = arith.constant 0 : i32
    return %c0_i32, %c0_i32_0 : i32, i32
  }
  func.func @transform_4(%arg0: i32) -> (i32, i32) {
    %c0_i32 = arith.constant 0 : i32
    %c0_i32_0 = arith.constant 0 : i32
    return %arg0, %c0_i32 : i32, i32
  }
}

module attributes {stable_mosaic.version = 11 : i64} {
  func.func @_conv_bn_act_kernel(%arg0: i32, %arg1: memref<32x576xbf16, #tpu.memory_space<vmem>>, %arg2: memref<576x64xbf16, #tpu.memory_space<vmem>>, %arg3: memref<1x64xf32, #tpu.memory_space<vmem>>, %arg4: memref<1x64xf32, #tpu.memory_space<vmem>>, %arg5: memref<32x64xf32, #tpu.memory_space<vmem>>, %arg6: memref<32x64xf32, #tpu.memory_space<vmem>>) attributes {dimension_semantics = [#tpu.dimension_semantics<parallel>], iteration_bounds = array<i64: 1>, scalar_prefetch = 0 : i64, scratch_operands = 0 : i64, tpu.core_type = #tpu.core_type<tc>, window_params = [{transform_indices = @transform_0, window_bounds = array<i64: 32, 576>}, {pipeline_mode = #tpu.pipeline_mode<synchronous>, transform_indices = @transform_1, window_bounds = array<i64: 576, 64>}, {pipeline_mode = #tpu.pipeline_mode<synchronous>, transform_indices = @transform_2, window_bounds = array<i64: 1, 64>}, {pipeline_mode = #tpu.pipeline_mode<synchronous>, transform_indices = @transform_3, window_bounds = array<i64: 1, 64>}, {transform_indices = @transform_4, window_bounds = array<i64: 32, 64>}, {transform_indices = @transform_5, window_bounds = array<i64: 32, 64>}]} {
    %c0 = arith.constant 0 : index
    %c0_0 = arith.constant 0 : index
    %0 = vector.load %arg1[%c0, %c0_0] : memref<32x576xbf16, #tpu.memory_space<vmem>>, vector<32x576xbf16>
    %c0_1 = arith.constant 0 : index
    %c0_2 = arith.constant 0 : index
    %1 = vector.load %arg2[%c0_1, %c0_2] : memref<576x64xbf16, #tpu.memory_space<vmem>>, vector<576x64xbf16>
    %cst = arith.constant dense<0.000000e+00> : vector<32x64xf32>
    %2 = tpu.matmul %0, %1, %cst {dimension_numbers = #tpu.dot_dimension_numbers<[1], [0], [0], [1], [0, 0, 1, 1], [], []>} : vector<32x576xbf16>, vector<576x64xbf16>, vector<32x64xf32> -> vector<32x64xf32>
    %c0_3 = arith.constant 0 : index
    %c0_4 = arith.constant 0 : index
    %3 = vector.load %arg3[%c0_3, %c0_4] : memref<1x64xf32, #tpu.memory_space<vmem>>, vector<1x64xf32>
    %4 = vector.broadcast %3 : vector<1x64xf32> to vector<32x64xf32>
    %5 = arith.mulf %2, %4 : vector<32x64xf32>
    %c0_5 = arith.constant 0 : index
    %c0_6 = arith.constant 0 : index
    %6 = vector.load %arg4[%c0_5, %c0_6] : memref<1x64xf32, #tpu.memory_space<vmem>>, vector<1x64xf32>
    %7 = vector.broadcast %6 : vector<1x64xf32> to vector<32x64xf32>
    %8 = arith.addf %5, %7 : vector<32x64xf32>
    %c0_7 = arith.constant 0 : index
    %c0_8 = arith.constant 0 : index
    %9 = vector.load %arg5[%c0_7, %c0_8] : memref<32x64xf32, #tpu.memory_space<vmem>>, vector<32x64xf32>
    %10 = arith.addf %8, %9 : vector<32x64xf32>
    %cst_9 = arith.constant 0.000000e+00 : f32
    %11 = vector.broadcast %cst_9 : f32 to vector<32x64xf32>
    %12 = arith.maximumf %10, %11 : vector<32x64xf32>
    %c0_10 = arith.constant 0 : index
    %c0_11 = arith.constant 0 : index
    %13 = vector.load %arg6[%c0_10, %c0_11] : memref<32x64xf32, #tpu.memory_space<vmem>>, vector<32x64xf32>
    tpu.vector_store %arg6[%c0_10, %c0_11], %12 {strides = array<i32>} : memref<32x64xf32, #tpu.memory_space<vmem>>, vector<32x64xf32>,
    return
  }
  func.func @transform_0(%arg0: i32) -> (i32, i32) {
    %c0_i32 = arith.constant 0 : i32
    %c0_i32_0 = arith.constant 0 : i32
    return %arg0, %c0_i32 : i32, i32
  }
  func.func @transform_1(%arg0: i32) -> (i32, i32) {
    %c0_i32 = arith.constant 0 : i32
    %c0_i32_0 = arith.constant 0 : i32
    %c0_i32_1 = arith.constant 0 : i32
    return %c0_i32, %c0_i32_0 : i32, i32
  }
  func.func @transform_2(%arg0: i32) -> (i32, i32) {
    %c0_i32 = arith.constant 0 : i32
    %c0_i32_0 = arith.constant 0 : i32
    %c0_i32_1 = arith.constant 0 : i32
    return %c0_i32, %c0_i32_0 : i32, i32
  }
  func.func @transform_3(%arg0: i32) -> (i32, i32) {
    %c0_i32 = arith.constant 0 : i32
    %c0_i32_0 = arith.constant 0 : i32
    %c0_i32_1 = arith.constant 0 : i32
    return %c0_i32, %c0_i32_0 : i32, i32
  }
  func.func @transform_4(%arg0: i32) -> (i32, i32) {
    %c0_i32 = arith.constant 0 : i32
    %c0_i32_0 = arith.constant 0 : i32
    return %arg0, %c0_i32 : i32, i32
  }
  func.func @transform_5(%arg0: i32) -> (i32, i32) {
    %c0_i32 = arith.constant 0 : i32
    %c0_i32_0 = arith.constant 0 : i32
    return %arg0, %c0_i32 : i32, i32
  }
}

module attributes {stable_mosaic.version = 11 : i64} {
  func.func @_conv_bn_act_kernel(%arg0: i32, %arg1: memref<32x576xbf16, #tpu.memory_space<vmem>>, %arg2: memref<576x64xbf16, #tpu.memory_space<vmem>>, %arg3: memref<1x64xf32, #tpu.memory_space<vmem>>, %arg4: memref<1x64xf32, #tpu.memory_space<vmem>>, %arg5: memref<32x64xf32, #tpu.memory_space<vmem>>, %arg6: memref<32x64xf32, #tpu.memory_space<vmem>>) attributes {dimension_semantics = [#tpu.dimension_semantics<parallel>], iteration_bounds = array<i64: 1>, scalar_prefetch = 0 : i64, scratch_operands = 0 : i64, tpu.core_type = #tpu.core_type<tc>, window_params = [{transform_indices = @transform_0, window_bounds = array<i64: 32, 576>}, {pipeline_mode = #tpu.pipeline_mode<synchronous>, transform_indices = @transform_1, window_bounds = array<i64: 576, 64>}, {pipeline_mode = #tpu.pipeline_mode<synchronous>, transform_indices = @transform_2, window_bounds = array<i64: 1, 64>}, {pipeline_mode = #tpu.pipeline_mode<synchronous>, transform_indices = @transform_3, window_bounds = array<i64: 1, 64>}, {transform_indices = @transform_4, window_bounds = array<i64: 32, 64>}, {transform_indices = @transform_5, window_bounds = array<i64: 32, 64>}]} {
    %c0 = arith.constant 0 : index
    %c0_0 = arith.constant 0 : index
    %0 = vector.load %arg1[%c0, %c0_0] : memref<32x576xbf16, #tpu.memory_space<vmem>>, vector<32x576xbf16>
    %c0_1 = arith.constant 0 : index
    %c0_2 = arith.constant 0 : index
    %1 = vector.load %arg2[%c0_1, %c0_2] : memref<576x64xbf16, #tpu.memory_space<vmem>>, vector<576x64xbf16>
    %cst = arith.constant dense<0.000000e+00> : vector<32x64xf32>
    %2 = tpu.matmul %0, %1, %cst {dimension_numbers = #tpu.dot_dimension_numbers<[1], [0], [0], [1], [0, 0, 1, 1], [], []>} : vector<32x576xbf16>, vector<576x64xbf16>, vector<32x64xf32> -> vector<32x64xf32>
    %c0_3 = arith.constant 0 : index
    %c0_4 = arith.constant 0 : index
    %3 = vector.load %arg3[%c0_3, %c0_4] : memref<1x64xf32, #tpu.memory_space<vmem>>, vector<1x64xf32>
    %4 = vector.broadcast %3 : vector<1x64xf32> to vector<32x64xf32>
    %5 = arith.mulf %2, %4 : vector<32x64xf32>
    %c0_5 = arith.constant 0 : index
    %c0_6 = arith.constant 0 : index
    %6 = vector.load %arg4[%c0_5, %c0_6] : memref<1x64xf32, #tpu.memory_space<vmem>>, vector<1x64xf32>
    %7 = vector.broadcast %6 : vector<1x64xf32> to vector<32x64xf32>
    %8 = arith.addf %5, %7 : vector<32x64xf32>
    %c0_7 = arith.constant 0 : index
    %c0_8 = arith.constant 0 : index
    %9 = vector.load %arg5[%c0_7, %c0_8] : memref<32x64xf32, #tpu.memory_space<vmem>>, vector<32x64xf32>
    %10 = arith.addf %8, %9 : vector<32x64xf32>
    %cst_9 = arith.constant 0.000000e+00 : f32
    %11 = vector.broadcast %cst_9 : f32 to vector<32x64xf32>
    %12 = arith.maximumf %10, %11 : vector<32x64xf32>
    %c0_10 = arith.constant 0 : index
    %c0_11 = arith.constant 0 : index
    %13 = vector.load %arg6[%c0_10, %c0_11] : memref<32x64xf32, #tpu.memory_space<vmem>>, vector<32x64xf32>
    tpu.vector_store %arg6[%c0_10, %c0_11], %12 {strides = array<i32>} : memref<32x64xf32, #tpu.memory_space<vmem>>, vector<32x64xf32>,
    return
  }
  func.func @transform_0(%arg0: i32) -> (i32, i32) {
    %c0_i32 = arith.constant 0 : i32
    %c0_i32_0 = arith.constant 0 : i32
    return %arg0, %c0_i32 : i32, i32
  }
  func.func @transform_1(%arg0: i32) -> (i32, i32) {
    %c0_i32 = arith.constant 0 : i32
    %c0_i32_0 = arith.constant 0 : i32
    %c0_i32_1 = arith.constant 0 : i32
    return %c0_i32, %c0_i32_0 : i32, i32
  }
  func.func @transform_2(%arg0: i32) -> (i32, i32) {
    %c0_i32 = arith.constant 0 : i32
    %c0_i32_0 = arith.constant 0 : i32
    %c0_i32_1 = arith.constant 0 : i32
    return %c0_i32, %c0_i32_0 : i32, i32
  }
  func.func @transform_3(%arg0: i32) -> (i32, i32) {
    %c0_i32 = arith.constant 0 : i32
    %c0_i32_0 = arith.constant 0 : i32
    %c0_i32_1 = arith.constant 0 : i32
    return %c0_i32, %c0_i32_0 : i32, i32
  }
  func.func @transform_4(%arg0: i32) -> (i32, i32) {
    %c0_i32 = arith.constant 0 : i32
    %c0_i32_0 = arith.constant 0 : i32
    return %arg0, %c0_i32 : i32, i32
  }
  func.func @transform_5(%arg0: i32) -> (i32, i32) {
    %c0_i32 = arith.constant 0 : i32
    %c0_i32_0 = arith.constant 0 : i32
    return %arg0, %c0_i32 : i32, i32
  }
}

</mosaic_0001>

<llo_original>
// kernel: resnet_encoder_forward.6
$region0: #{resnet_encoder_forward.6}
  #allocation0 [shape = 'u32[]', space=smem, size = 0x4, offset = 0x4, fixed_abs, tag = 'smem constant byte address 0x4 - core index']
  #allocation1 [shape = 'u32[144,128]{1,0:T(1,128)}', space=vmem, size = 0x12000, scoped, tag = 'internal scratch']
  %s0 = inlined_call_operand.vmem [shape: bf16[128,147], index: 0, kind: input, shape index: {}]
  %s1 = inlined_call_operand.vmem [shape: bf16[147,64], index: 1, kind: input, shape index: {}]
  %s2 = inlined_call_operand.vmem [shape: f32[1,64], index: 2, kind: input, shape index: {}]
  %s3 = inlined_call_operand.vmem [shape: f32[1,64], index: 3, kind: input, shape index: {}]
  %s4 = inlined_call_operand.vmem [shape: f32[128,64], index: 4, kind: output, shape index: {}]
  %s5 = sld [smem:[#allocation0]]
  $region26: #{resnet_encoder_forward.6} parent=0
    _
  %s7 = ssub.s32 1, %s5
  %s8 = scalar_select 0, %s7, %s5
  // Predicated region
  $region2: #{resnet_encoder_forward.6} parent=0 // pred_check
    _
  $region3: #{resnet_encoder_forward.6} parent=0 // pred_check_branch
    %10 = sbr.rel (0) target = $region5
  $region4: #{resnet_encoder_forward.6} parent=0 // pred_region
    _
  $region5: #{resnet_encoder_forward.6} parent=0 // pred_fallthru
    _
  // Predicated region
  $region6: #{resnet_encoder_forward.6} parent=0 // pred_check
    _
  $region7: #{resnet_encoder_forward.6} parent=0 // pred_check_branch
    %12 = sbr.rel (0) target = $region9
  $region8: #{resnet_encoder_forward.6} parent=0 // pred_region
    _
  $region9: #{resnet_encoder_forward.6} parent=0 // pred_fallthru
    _
  // Predicated region
  $region10: #{resnet_encoder_forward.6} parent=0 // pred_check
    _
  $region11: #{resnet_encoder_forward.6} parent=0 // pred_check_branch
    %14 = sbr.rel (0) target = $region13
  $region12: #{resnet_encoder_forward.6} parent=0 // pred_region
    _
  $region13: #{resnet_encoder_forward.6} parent=0 // pred_fallthru
    _
  // Predicated region
  $region14: #{resnet_encoder_forward.6} parent=0 // pred_check
    _
  $region15: #{resnet_encoder_forward.6} parent=0 // pred_check_branch
    %16 = sbr.rel (0) target = $region17
  $region16: #{resnet_encoder_forward.6} parent=0 // pred_region
    _
  $region17: #{resnet_encoder_forward.6} parent=0 // pred_fallthru
    _
  %v18 = vld [vmem:[%s0] sm:$0xff]
  %v19 = vld [vmem:[%s0 + $0x8] sm:$0xff]
  %v20 = vld [vmem:[%s0 + $0x10] sm:$0xff]
  %v21 = vld [vmem:[%s0 + $0x18] sm:$0xff]
  %v22 = vld [vmem:[%s0 + $0x20] sm:$0xff]
  %v23 = vld [vmem:[%s0 + $0x28] sm:$0xff]
  %v24 = vld [vmem:[%s0 + $0x30] sm:$0xff]
  %v25 = vld [vmem:[%s0 + $0x38] sm:$0xff]
  %v26 = vld [vmem:[%s0 + $0x40] sm:$0xff]
  %v27 = vld [vmem:[%s0 + $0x48] sm:$0xff]
  %v28 = vld [vmem:[%s0 + $0x50] sm:$0xff]
  %v29 = vld [vmem:[%s0 + $0x58] sm:$0xff]
  %v30 = vld [vmem:[%s0 + $0x60] sm:$0xff]
  %v31 = vld [vmem:[%s0 + $0x68] sm:$0xff]
  %v32 = vld [vmem:[%s0 + $0x70] sm:$0xff]
  %v33 = vld [vmem:[%s0 + $0x78] sm:$0xff]
  %v34 = vld [vmem:[%s1] sm:$0xf]
  %v35 = vld [vmem:[%s1 + $0x4] sm:$0xf]
  %v36 = vld [vmem:[%s1 + $0x8] sm:$0xf]
  %v37 = vld [vmem:[%s1 + $0xc] sm:$0xf]
  %v38 = vld [vmem:[%s1 + $0x10] sm:$0xf]
  %v39 = vld [vmem:[%s1 + $0x14] sm:$0xf]
  %v40 = vld [vmem:[%s1 + $0x18] sm:$0xf]
  %v41 = vld [vmem:[%s1 + $0x1c] sm:$0xf]
  %v42 = vld [vmem:[%s1 + $0x20] sm:$0xf]
  %v43 = vld [vmem:[%s1 + $0x24] sm:$0xf]
  %v44 = vld [vmem:[%s1 + $0x28] sm:$0xf]
  %v45 = vld [vmem:[%s1 + $0x2c] sm:$0xf]
  %v46 = vld [vmem:[%s1 + $0x30] sm:$0xf]
  %v47 = vld [vmem:[%s1 + $0x34] sm:$0xf]
  %v48 = vld [vmem:[%s1 + $0x38] sm:$0xf]
  %v49 = vld [vmem:[%s1 + $0x3c] sm:$0xf]
  %v50 = vld [vmem:[%s1 + $0x40] sm:$0xf]
  %v51 = vld [vmem:[%s1 + $0x44] sm:$0xf]
  %v52 = vld [vmem:[%s1 + $0x48] sm:$0x3]
  %v69 = vunpack.c.l.b16 %v18
  %v70 = vunpack.c.h.b16 %v18
  %v71 = vunpack.c.l.b16 %v19
  %v72 = vunpack.c.h.b16 %v19
  %v73 = vunpack.c.l.b16 %v20
  %v74 = vunpack.c.h.b16 %v20
  %v75 = vunpack.c.l.b16 %v21
  %v76 = vunpack.c.h.b16 %v21
  %v77 = vunpack.c.l.b16 %v22
  %v78 = vunpack.c.h.b16 %v22
  %v79 = vunpack.c.l.b16 %v23
  %v80 = vunpack.c.h.b16 %v23
  %v81 = vunpack.c.l.b16 %v24
  %v82 = vunpack.c.h.b16 %v24
  %v83 = vunpack.c.l.b16 %v25
  %v84 = vunpack.c.h.b16 %v25
  %v85 = vunpack.c.l.b16 %v26
  %v86 = vunpack.c.h.b16 %v26
  %v87 = vunpack.c.l.b16 %v27
  %v88 = vunpack.c.h.b16 %v27
  %v89 = vunpack.c.l.b16 %v28
  %v90 = vunpack.c.h.b16 %v28
  %v91 = vunpack.c.l.b16 %v29
  %v92 = vunpack.c.h.b16 %v29
  %v93 = vunpack.c.l.b16 %v30
  %v94 = vunpack.c.h.b16 %v30
  %v95 = vunpack.c.l.b16 %v31
  %v96 = vunpack.c.h.b16 %v31
  %v97 = vunpack.c.l.b16 %v32
  %v98 = vunpack.c.h.b16 %v32
  %v99 = vunpack.c.l.b16 %v33
  %v100 = vunpack.c.h.b16 %v33
  %v101 = vpack.c.b16 %v71, %v69
  %v102 = vpack.c.b16 %v72, %v70
  %v103 = vpack.c.b16 %v75, %v73
  %v104 = vpack.c.b16 %v76, %v74
  %v105 = vpack.c.b16 %v79, %v77
  %v106 = vpack.c.b16 %v80, %v78
  %v107 = vpack.c.b16 %v83, %v81
  %v108 = vpack.c.b16 %v84, %v82
  %v109 = vpack.c.b16 %v87, %v85
  %v110 = vpack.c.b16 %v88, %v86
  %v111 = vpack.c.b16 %v91, %v89
  %v112 = vpack.c.b16 %v92, %v90
  %v113 = vpack.c.b16 %v95, %v93
  %v114 = vpack.c.b16 %v96, %v94
  %v115 = vpack.c.b16 %v99, %v97
  %v116 = vpack.c.b16 %v100, %v98
  %v144 = vunpack.c.l.b16 %v34
  %v145 = vunpack.c.l.b16 %v35
  %v146 = vunpack.c.l.b16 %v36
  %v147 = vunpack.c.l.b16 %v37
  %v148 = vunpack.c.l.b16 %v38
  %v149 = vunpack.c.l.b16 %v39
  %v150 = vunpack.c.l.b16 %v40
  %v151 = vunpack.c.l.b16 %v41
  %v152 = vunpack.c.l.b16 %v42
  %v153 = vunpack.c.l.b16 %v43
  %v154 = vunpack.c.l.b16 %v44
  %v155 = vunpack.c.l.b16 %v45
  %v156 = vunpack.c.l.b16 %v46
  %v157 = vunpack.c.l.b16 %v47
  %v158 = vunpack.c.l.b16 %v48
  %v159 = vunpack.c.l.b16 %v49
  %v160 = vunpack.c.l.b16 %v50
  %v161 = vunpack.c.l.b16 %v51
  %v162 = vunpack.c.l.b16 %v52
  %v163 = vpack.c.b16 %v145, %v144
  %v164 = vpack.c.b16 %v147, %v146
  %v165 = vpack.c.b16 %v149, %v148
  %v166 = vpack.c.b16 %v151, %v150
  %v167 = vpack.c.b16 %v153, %v152
  %v168 = vpack.c.b16 %v155, %v154
  %v169 = vpack.c.b16 %v157, %v156
  %v170 = vpack.c.b16 %v159, %v158
  %v171 = vpack.c.b16 %v161, %v160
  %v172 = vpack.c.b16 %v162, %v162
  %vm182 = vcmask 154624
  %v184 = vsel %vm182, %v102, 0
  %v187 = vsel %vm182, %v104, 0
  %v190 = vsel %vm182, %v106, 0
  %v193 = vsel %vm182, %v108, 0
  %v196 = vsel %vm182, %v110, 0
  %v199 = vsel %vm182, %v112, 0
  %v202 = vsel %vm182, %v114, 0
  %v205 = vsel %vm182, %v116, 0
  %vm207 = vcmask 1040384
  %vm208 = vcmask 1041408
  %v209 = vsel %vm207, 4294967295, 65535
  %v210 = vsel %vm208, %v209, 0
  %v212 = vand.u32 %v172, %v210
  %214 = vmatprep.subr.bf16.mxu0 0
  %215 = vmatpush1.bf16.msra.mxu0 %v170
  %216 = vmatprep.subr.bf16.mxu0 0
  %217 = vmatpush1.bf16.msra.mxu0 %v169
  %218 = vmatprep.subr.bf16.mxu0 0
  %219 = vmatpush1.bf16.msra.mxu0 %v168
  %220 = vmatprep.subr.bf16.mxu0 0
  %221 = vmatpush1.bf16.msra.mxu0 %v167
  %222 = vmatprep.subr.bf16.mxu0 0
  %223 = vmatpush1.bf16.msra.mxu0 %v166
  %224 = vmatprep.subr.bf16.mxu0 0
  %225 = vmatpush1.bf16.msra.mxu0 %v165
  %226 = vmatprep.subr.bf16.mxu0 0
  %227 = vmatpush1.bf16.msra.mxu0 %v164
  %228 = vmatprep.subr.bf16.mxu0 0
  %229 = vmatpush1.bf16.msra.mxu0 %v163
  %230 = vmatprep.subr.bf16.mxu0 0
  %231 = vmatpush2.bf16.msra.mxu0 0
  %232 = vmatprep.subr.bf16.mxu0 0
  %233 = vmatpush2.bf16.msra.mxu0 0
  %234 = vmatprep.subr.bf16.mxu0 0
  %235 = vmatpush2.bf16.msra.mxu0 0
  %236 = vmatprep.subr.bf16.mxu0 0
  %237 = vmatpush2.bf16.msra.mxu0 0
  %238 = vmatprep.subr.bf16.mxu0 0
  %239 = vmatpush2.bf16.msra.mxu0 0
  %240 = vmatprep.subr.bf16.mxu0 0
  %241 = vmatpush2.bf16.msra.mxu0 0
  %242 = vmatprep.subr.bf16.mxu0 0
  %243 = vmatpush2.bf16.msra.mxu0 %v212
  %244 = vmatprep.subr.bf16.mxu0 0
  %245 = vmatpush2.bf16.msra.mxu0 %v171
  %246 = vmatprep.mubr.bf16.mxu0 %v184
  %247 = vmatmul.mubr.bf16.gmra.mxu0 %v101
  %v248 = vpop.f32.mrf.mxu0
  %v249 = vadd.f32 0.0, %v248
  %v250 = vpop.f32.mrf.mxu0
  %v251 = vpop.f32.mrf.mxu0
  %v252 = vadd.f32 0.0, %v251
  %v253 = vpop.f32.mrf.mxu0
  %254 = vmatprep.mubr.bf16.mxu0 %v187
  %255 = vmatmul.mubr.bf16.gmra.mxu0 %v103
  %v256 = vpop.f32.mrf.mxu0
  %v257 = vadd.f32 0.0, %v256
  %v258 = vpop.f32.mrf.mxu0
  %v259 = vpop.f32.mrf.mxu0
  %v260 = vadd.f32 0.0, %v259
  %v261 = vpop.f32.mrf.mxu0
  %262 = vmatprep.mubr.bf16.mxu0 %v190
  %263 = vmatmul.mubr.bf16.gmra.mxu0 %v105
  %v264 = vpop.f32.mrf.mxu0
  %v265 = vadd.f32 0.0, %v264
  %v266 = vpop.f32.mrf.mxu0
  %v267 = vpop.f32.mrf.mxu0
  %v268 = vadd.f32 0.0, %v267
  %v269 = vpop.f32.mrf.mxu0
  %270 = vmatprep.mubr.bf16.mxu0 %v193
  %271 = vmatmul.mubr.bf16.gmra.mxu0 %v107
  %v272 = vpop.f32.mrf.mxu0
  %v273 = vadd.f32 0.0, %v272
  %v274 = vpop.f32.mrf.mxu0
  %v275 = vpop.f32.mrf.mxu0
  %v276 = vadd.f32 0.0, %v275
  %v277 = vpop.f32.mrf.mxu0
  %278 = vmatprep.mubr.bf16.mxu0 %v196
  %279 = vmatmul.mubr.bf16.gmra.mxu0 %v109
  %v280 = vpop.f32.mrf.mxu0
  %v281 = vadd.f32 0.0, %v280
  %v282 = vpop.f32.mrf.mxu0
  %v283 = vpop.f32.mrf.mxu0
  %v284 = vadd.f32 0.0, %v283
  %v285 = vpop.f32.mrf.mxu0
  %286 = vmatprep.mubr.bf16.mxu0 %v199
  %287 = vmatmul.mubr.bf16.gmra.mxu0 %v111
  %v288 = vpop.f32.mrf.mxu0
  %v289 = vadd.f32 0.0, %v288
  %v290 = vpop.f32.mrf.mxu0
  %v291 = vpop.f32.mrf.mxu0
  %v292 = vadd.f32 0.0, %v291
  %v293 = vpop.f32.mrf.mxu0
  %294 = vmatprep.mubr.bf16.mxu0 %v202
  %295 = vmatmul.mubr.bf16.gmra.mxu0 %v113
  %v296 = vpop.f32.mrf.mxu0
  %v297 = vadd.f32 0.0, %v296
  %v298 = vpop.f32.mrf.mxu0
  %v299 = vpop.f32.mrf.mxu0
  %v300 = vadd.f32 0.0, %v299
  %v301 = vpop.f32.mrf.mxu0
  %302 = vmatprep.mubr.bf16.mxu0 %v205
  %303 = vmatmul.mubr.bf16.gmra.mxu0 %v115
  %v304 = vpop.f32.mrf.mxu0
  %v305 = vadd.f32 0.0, %v304
  %v306 = vpop.f32.mrf.mxu0
  %v307 = vpop.f32.mrf.mxu0
  %v308 = vadd.f32 0.0, %v307
  %v309 = vpop.f32.mrf.mxu0
  %310 = vdwg.mxu0
  %v311 = vld [vmem:[%s2] sm:$0x1]
  %v313 = vlaneseq
  %v314 = vshrl.u32 %v313, 7
  %v315 = vsub.s32 0, %v314
  %v316 = vrot.slane %v311, %v315
  %v318 = vmul.f32 %v249, %v316
  %v319 = vmul.f32 %v252, %v316
  %v320 = vmul.f32 %v257, %v316
  %v321 = vmul.f32 %v260, %v316
  %v322 = vmul.f32 %v265, %v316
  %v323 = vmul.f32 %v268, %v316
  %v324 = vmul.f32 %v273, %v316
  %v325 = vmul.f32 %v276, %v316
  %v326 = vmul.f32 %v281, %v316
  %v327 = vmul.f32 %v284, %v316
  %v328 = vmul.f32 %v289, %v316
  %v329 = vmul.f32 %v292, %v316
  %v330 = vmul.f32 %v297, %v316
  %v331 = vmul.f32 %v300, %v316
  %v332 = vmul.f32 %v305, %v316
  %v333 = vmul.f32 %v308, %v316
  %v334 = vld [vmem:[%s3] sm:$0x1]
  %v336 = vlaneseq
  %v337 = vshrl.u32 %v336, 7
  %v338 = vsub.s32 0, %v337
  %v339 = vrot.slane %v334, %v338
  %v341 = vadd.f32 %v318, %v339
  %v342 = vadd.f32 %v319, %v339
  %v343 = vadd.f32 %v320, %v339
  %v344 = vadd.f32 %v321, %v339
  %v345 = vadd.f32 %v322, %v339
  %v346 = vadd.f32 %v323, %v339
  %v347 = vadd.f32 %v324, %v339
  %v348 = vadd.f32 %v325, %v339
  %v349 = vadd.f32 %v326, %v339
  %v350 = vadd.f32 %v327, %v339
  %v351 = vadd.f32 %v328, %v339
  %v352 = vadd.f32 %v329, %v339
  %v353 = vadd.f32 %v330, %v339
  %v354 = vadd.f32 %v331, %v339
  %v355 = vadd.f32 %v332, %v339
  %v356 = vadd.f32 %v333, %v339
  %v357 = vmax.f32 %v341, 0.0
  %v358 = vmax.f32 %v342, 0.0
  %v359 = vmax.f32 %v343, 0.0
  %v360 = vmax.f32 %v344, 0.0
  %v361 = vmax.f32 %v345, 0.0
  %v362 = vmax.f32 %v346, 0.0
  %v363 = vmax.f32 %v347, 0.0
  %v364 = vmax.f32 %v348, 0.0
  %v365 = vmax.f32 %v349, 0.0
  %v366 = vmax.f32 %v350, 0.0
  %v367 = vmax.f32 %v351, 0.0
  %v368 = vmax.f32 %v352, 0.0
  %v369 = vmax.f32 %v353, 0.0
  %v370 = vmax.f32 %v354, 0.0
  %v371 = vmax.f32 %v355, 0.0
  %v372 = vmax.f32 %v356, 0.0
  %vm373 = vcmask 523264
  %374 = vst.msk [vmem:[%s4] sm:$0xff] %vm373, %v357
  %375 = vst.msk [vmem:[%s4 + $0x8] sm:$0xff] %vm373, %v358
  %376 = vst.msk [vmem:[%s4 + $0x10] sm:$0xff] %vm373, %v359
  %377 = vst.msk [vmem:[%s4 + $0x18] sm:$0xff] %vm373, %v360
  %378 = vst.msk [vmem:[%s4 + $0x20] sm:$0xff] %vm373, %v361
  %379 = vst.msk [vmem:[%s4 + $0x28] sm:$0xff] %vm373, %v362
  %380 = vst.msk [vmem:[%s4 + $0x30] sm:$0xff] %vm373, %v363
  %381 = vst.msk [vmem:[%s4 + $0x38] sm:$0xff] %vm373, %v364
  %382 = vst.msk [vmem:[%s4 + $0x40] sm:$0xff] %vm373, %v365
  %383 = vst.msk [vmem:[%s4 + $0x48] sm:$0xff] %vm373, %v366
  %384 = vst.msk [vmem:[%s4 + $0x50] sm:$0xff] %vm373, %v367
  %385 = vst.msk [vmem:[%s4 + $0x58] sm:$0xff] %vm373, %v368
  %386 = vst.msk [vmem:[%s4 + $0x60] sm:$0xff] %vm373, %v369
  %387 = vst.msk [vmem:[%s4 + $0x68] sm:$0xff] %vm373, %v370
  %388 = vst.msk [vmem:[%s4 + $0x70] sm:$0xff] %vm373, %v371
  %389 = vst.msk [vmem:[%s4 + $0x78] sm:$0xff] %vm373, %v372
  // Predicated region
  $region18: #{resnet_encoder_forward.6} parent=0 // pred_check
    _
  $region19: #{resnet_encoder_forward.6} parent=0 // pred_check_branch
    %391 = sbr.rel (0) target = $region21
  $region20: #{resnet_encoder_forward.6} parent=0 // pred_region
    _
  $region21: #{resnet_encoder_forward.6} parent=0 // pred_fallthru
    _
  // Predicated region
  $region22: #{resnet_encoder_forward.6} parent=0 // pred_check
    _
  $region23: #{resnet_encoder_forward.6} parent=0 // pred_check_branch
    %393 = sbr.rel (0) target = $region25
  $region24: #{resnet_encoder_forward.6} parent=0 // pred_region
    _
  $region25: #{resnet_encoder_forward.6} parent=0 // pred_fallthru
    _

// kernel: resnet_encoder_forward.7
$region0: #{resnet_encoder_forward.7}
  #allocation0 [shape = 'u32[]', space=smem, size = 0x4, offset = 0x4, fixed_abs, tag = 'smem constant byte address 0x4 - core index']
  #allocation1 [shape = 'u32[144,128]{1,0:T(1,128)}', space=vmem, size = 0x12000, scoped, tag = 'internal scratch']
  %s0 = inlined_call_operand.vmem [shape: f32[9,32,64], index: 0, kind: input, shape index: {}]
  %s1 = inlined_call_operand.vmem [shape: f32[32,64], index: 1, kind: output, shape index: {}]
  %s2 = sld [smem:[#allocation0]]
  $region14: #{resnet_encoder_forward.7} parent=0
    _
  %s4 = ssub.s32 1, %s2
  %s5 = scalar_select 0, %s4, %s2
  // Predicated region
  $region2: #{resnet_encoder_forward.7} parent=0 // pred_check
    _
  $region3: #{resnet_encoder_forward.7} parent=0 // pred_check_branch
    %7 = sbr.rel (0) target = $region5
  $region4: #{resnet_encoder_forward.7} parent=0 // pred_region
    _
  $region5: #{resnet_encoder_forward.7} parent=0 // pred_fallthru
    _
  %v8 = vld [vmem:[%s0] sm:$0xff]
  %v9 = vld [vmem:[%s0 + $0x8] sm:$0xff]
  %v10 = vld [vmem:[%s0 + $0x10] sm:$0xff]
  %v11 = vld [vmem:[%s0 + $0x18] sm:$0xff]
  %s12 = scalar_lea.vmem %s0, 32
  %v13 = vld [vmem:[%s12] sm:$0xff]
  %v14 = vld [vmem:[%s12 + $0x8] sm:$0xff]
  %v15 = vld [vmem:[%s12 + $0x10] sm:$0xff]
  %v16 = vld [vmem:[%s12 + $0x18] sm:$0xff]
  %v17 = vmax.f32 %v8, %v13
  %v18 = vmax.f32 %v9, %v14
  %v19 = vmax.f32 %v10, %v15
  %v20 = vmax.f32 %v11, %v16
  %s21 = scalar_lea.vmem %s0, 64
  %v22 = vld [vmem:[%s21] sm:$0xff]
  %v23 = vld [vmem:[%s21 + $0x8] sm:$0xff]
  %v24 = vld [vmem:[%s21 + $0x10] sm:$0xff]
  %v25 = vld [vmem:[%s21 + $0x18] sm:$0xff]
  %v26 = vmax.f32 %v17, %v22
  %v27 = vmax.f32 %v18, %v23
  %v28 = vmax.f32 %v19, %v24
  %v29 = vmax.f32 %v20, %v25
  %s30 = scalar_lea.vmem %s0, 96
  %v31 = vld [vmem:[%s30] sm:$0xff]
  %v32 = vld [vmem:[%s30 + $0x8] sm:$0xff]
  %v33 = vld [vmem:[%s30 + $0x10] sm:$0xff]
  %v34 = vld [vmem:[%s30 + $0x18] sm:$0xff]
  %v35 = vmax.f32 %v26, %v31
  %v36 = vmax.f32 %v27, %v32
  %v37 = vmax.f32 %v28, %v33
  %v38 = vmax.f32 %v29, %v34
  %s39 = scalar_lea.vmem %s0, 128
  %v40 = vld [vmem:[%s39] sm:$0xff]
  %v41 = vld [vmem:[%s39 + $0x8] sm:$0xff]
  %v42 = vld [vmem:[%s39 + $0x10] sm:$0xff]
  %v43 = vld [vmem:[%s39 + $0x18] sm:$0xff]
  %v44 = vmax.f32 %v35, %v40
  %v45 = vmax.f32 %v36, %v41
  %v46 = vmax.f32 %v37, %v42
  %v47 = vmax.f32 %v38, %v43
  %s48 = scalar_lea.vmem %s0, 160
  %v49 = vld [vmem:[%s48] sm:$0xff]
  %v50 = vld [vmem:[%s48 + $0x8] sm:$0xff]
  %v51 = vld [vmem:[%s48 + $0x10] sm:$0xff]
  %v52 = vld [vmem:[%s48 + $0x18] sm:$0xff]
  %v53 = vmax.f32 %v44, %v49
  %v54 = vmax.f32 %v45, %v50
  %v55 = vmax.f32 %v46, %v51
  %v56 = vmax.f32 %v47, %v52
  %s57 = scalar_lea.vmem %s0, 192
  %v58 = vld [vmem:[%s57] sm:$0xff]
  %v59 = vld [vmem:[%s57 + $0x8] sm:$0xff]
  %v60 = vld [vmem:[%s57 + $0x10] sm:$0xff]
  %v61 = vld [vmem:[%s57 + $0x18] sm:$0xff]
  %v62 = vmax.f32 %v53, %v58
  %v63 = vmax.f32 %v54, %v59
  %v64 = vmax.f32 %v55, %v60
  %v65 = vmax.f32 %v56, %v61
  %s66 = scalar_lea.vmem %s0, 224
  %v67 = vld [vmem:[%s66] sm:$0xff]
  %v68 = vld [vmem:[%s66 + $0x8] sm:$0xff]
  %v69 = vld [vmem:[%s66 + $0x10] sm:$0xff]
  %v70 = vld [vmem:[%s66 + $0x18] sm:$0xff]
  %v71 = vmax.f32 %v62, %v67
  %v72 = vmax.f32 %v63, %v68
  %v73 = vmax.f32 %v64, %v69
  %v74 = vmax.f32 %v65, %v70
  %s75 = scalar_lea.vmem %s0, 256
  %v76 = vld [vmem:[%s75] sm:$0xff]
  %v77 = vld [vmem:[%s75 + $0x8] sm:$0xff]
  %v78 = vld [vmem:[%s75 + $0x10] sm:$0xff]
  %v79 = vld [vmem:[%s75 + $0x18] sm:$0xff]
  %v80 = vmax.f32 %v71, %v76
  %v81 = vmax.f32 %v72, %v77
  %v82 = vmax.f32 %v73, %v78
  %v83 = vmax.f32 %v74, %v79
  %vm84 = vcmask 523264
  %85 = vst.msk [vmem:[%s1] sm:$0xff] %vm84, %v80
  %86 = vst.msk [vmem:[%s1 + $0x8] sm:$0xff] %vm84, %v81
  %87 = vst.msk [vmem:[%s1 + $0x10] sm:$0xff] %vm84, %v82
  %88 = vst.msk [vmem:[%s1 + $0x18] sm:$0xff] %vm84, %v83
  // Predicated region
  $region6: #{resnet_encoder_forward.7} parent=0 // pred_check
    _
  $region7: #{resnet_encoder_forward.7} parent=0 // pred_check_branch
    %90 = sbr.rel (0) target = $region9
  $region8: #{resnet_encoder_forward.7} parent=0 // pred_region
    _
  $region9: #{resnet_encoder_forward.7} parent=0 // pred_fallthru
    _
  // Predicated region
  $region10: #{resnet_encoder_forward.7} parent=0 // pred_check
    _
  $region11: #{resnet_encoder_forward.7} parent=0 // pred_check_branch
    %92 = sbr.rel (0) target = $region13
  $region12: #{resnet_encoder_forward.7} parent=0 // pred_region
    _
  $region13: #{resnet_encoder_forward.7} parent=0 // pred_fallthru
    _

// kernel: resnet_encoder_forward.8
$region0: #{resnet_encoder_forward.8}
  #allocation0 [shape = 'u32[]', space=smem, size = 0x4, offset = 0x4, fixed_abs, tag = 'smem constant byte address 0x4 - core index']
  #allocation1 [shape = 'u32[144,128]{1,0:T(1,128)}', space=vmem, size = 0x12000, scoped, tag = 'internal scratch']
  %s0 = inlined_call_operand.vmem [shape: bf16[32,576], index: 0, kind: input, shape index: {}]
  %s1 = inlined_call_operand.vmem [shape: bf16[576,64], index: 1, kind: input, shape index: {}]
  %s2 = inlined_call_operand.vmem [shape: f32[1,64], index: 2, kind: input, shape index: {}]
  %s3 = inlined_call_operand.vmem [shape: f32[1,64], index: 3, kind: input, shape index: {}]
  %s4 = inlined_call_operand.vmem [shape: f32[32,64], index: 4, kind: output, shape index: {}]
  %s5 = sld [smem:[#allocation0]]
  $region26: #{resnet_encoder_forward.8} parent=0
    _
  %s7 = ssub.s32 1, %s5
  %s8 = scalar_select 0, %s7, %s5
  // Predicated region
  $region2: #{resnet_encoder_forward.8} parent=0 // pred_check
    _
  $region3: #{resnet_encoder_forward.8} parent=0 // pred_check_branch
    %10 = sbr.rel (0) target = $region5
  $region4: #{resnet_encoder_forward.8} parent=0 // pred_region
    _
  $region5: #{resnet_encoder_forward.8} parent=0 // pred_fallthru
    _
  // Predicated region
  $region6: #{resnet_encoder_forward.8} parent=0 // pred_check
    _
  $region7: #{resnet_encoder_forward.8} parent=0 // pred_check_branch
    %12 = sbr.rel (0) target = $region9
  $region8: #{resnet_encoder_forward.8} parent=0 // pred_region
    _
  $region9: #{resnet_encoder_forward.8} parent=0 // pred_fallthru
    _
  // Predicated region
  $region10: #{resnet_encoder_forward.8} parent=0 // pred_check
    _
  $region11: #{resnet_encoder_forward.8} parent=0 // pred_check_branch
    %14 = sbr.rel (0) target = $region13
  $region12: #{resnet_encoder_forward.8} parent=0 // pred_region
    _
  $region13: #{resnet_encoder_forward.8} parent=0 // pred_fallthru
    _
  // Predicated region
  $region14: #{resnet_encoder_forward.8} parent=0 // pred_check
    _
  $region15: #{resnet_encoder_forward.8} parent=0 // pred_check_branch
    %16 = sbr.rel (0) target = $region17
  $region16: #{resnet_encoder_forward.8} parent=0 // pred_region
    _
  $region17: #{resnet_encoder_forward.8} parent=0 // pred_fallthru
    _
  %v18 = vld [vmem:[%s0] sm:$0xff]
  %v19 = vld [vmem:[%s0 + $0x8] sm:$0xff]
  %v20 = vld [vmem:[%s0 + $0x10] sm:$0xf]
  %v21 = vld [vmem:[%s0 + $0x14] sm:$0xff]
  %v22 = vld [vmem:[%s0 + $0x1c] sm:$0xff]
  %v23 = vld [vmem:[%s0 + $0x24] sm:$0xf]
  %v24 = vld [vmem:[%s0 + $0x28] sm:$0xff]
  %v25 = vld [vmem:[%s0 + $0x30] sm:$0xff]
  %v26 = vld [vmem:[%s0 + $0x38] sm:$0xf]
  %v27 = vld [vmem:[%s0 + $0x3c] sm:$0xff]
  %v28 = vld [vmem:[%s0 + $0x44] sm:$0xff]
  %v29 = vld [vmem:[%s0 + $0x4c] sm:$0xf]
  %v30 = vld [vmem:[%s1] sm:$0xf]
  %v31 = vld [vmem:[%s1 + $0x4] sm:$0xf]
  %v32 = vld [vmem:[%s1 + $0x8] sm:$0xf]
  %v33 = vld [vmem:[%s1 + $0xc] sm:$0xf]
  %v34 = vld [vmem:[%s1 + $0x10] sm:$0xf]
  %v35 = vld [vmem:[%s1 + $0x14] sm:$0xf]
  %v36 = vld [vmem:[%s1 + $0x18] sm:$0xf]
  %v37 = vld [vmem:[%s1 + $0x1c] sm:$0xf]
  %v38 = vld [vmem:[%s1 + $0x20] sm:$0xf]
  %v39 = vld [vmem:[%s1 + $0x24] sm:$0xf]
  %v40 = vld [vmem:[%s1 + $0x28] sm:$0xf]
  %v41 = vld [vmem:[%s1 + $0x2c] sm:$0xf]
  %v42 = vld [vmem:[%s1 + $0x30] sm:$0xf]
  %v43 = vld [vmem:[%s1 + $0x34] sm:$0xf]
  %v44 = vld [vmem:[%s1 + $0x38] sm:$0xf]
  %v45 = vld [vmem:[%s1 + $0x3c] sm:$0xf]
  %v46 = vld [vmem:[%s1 + $0x40] sm:$0xf]
  %v47 = vld [vmem:[%s1 + $0x44] sm:$0xf]
  %v48 = vld [vmem:[%s1 + $0x48] sm:$0xf]
  %v49 = vld [vmem:[%s1 + $0x4c] sm:$0xf]
  %v50 = vld [vmem:[%s1 + $0x50] sm:$0xf]
  %v51 = vld [vmem:[%s1 + $0x54] sm:$0xf]
  %v52 = vld [vmem:[%s1 + $0x58] sm:$0xf]
  %v53 = vld [vmem:[%s1 + $0x5c] sm:$0xf]
  %v54 = vld [vmem:[%s1 + $0x60] sm:$0xf]
  %v55 = vld [vmem:[%s1 + $0x64] sm:$0xf]
  %v56 = vld [vmem:[%s1 + $0x68] sm:$0xf]
  %v57 = vld [vmem:[%s1 + $0x6c] sm:$0xf]
  %v58 = vld [vmem:[%s1 + $0x70] sm:$0xf]
  %v59 = vld [vmem:[%s1 + $0x74] sm:$0xf]
  %v60 = vld [vmem:[%s1 + $0x78] sm:$0xf]
  %v61 = vld [vmem:[%s1 + $0x7c] sm:$0xf]
  %v62 = vld [vmem:[%s1 + $0x80] sm:$0xf]
  %v63 = vld [vmem:[%s1 + $0x84] sm:$0xf]
  %v64 = vld [vmem:[%s1 + $0x88] sm:$0xf]
  %v65 = vld [vmem:[%s1 + $0x8c] sm:$0xf]
  %v66 = vld [vmem:[%s1 + $0x90] sm:$0xf]
  %v67 = vld [vmem:[%s1 + $0x94] sm:$0xf]
  %v68 = vld [vmem:[%s1 + $0x98] sm:$0xf]
  %v69 = vld [vmem:[%s1 + $0x9c] sm:$0xf]
  %v70 = vld [vmem:[%s1 + $0xa0] sm:$0xf]
  %v71 = vld [vmem:[%s1 + $0xa4] sm:$0xf]
  %v72 = vld [vmem:[%s1 + $0xa8] sm:$0xf]
  %v73 = vld [vmem:[%s1 + $0xac] sm:$0xf]
  %v74 = vld [vmem:[%s1 + $0xb0] sm:$0xf]
  %v75 = vld [vmem:[%s1 + $0xb4] sm:$0xf]
  %v76 = vld [vmem:[%s1 + $0xb8] sm:$0xf]
  %v77 = vld [vmem:[%s1 + $0xbc] sm:$0xf]
  %v78 = vld [vmem:[%s1 + $0xc0] sm:$0xf]
  %v79 = vld [vmem:[%s1 + $0xc4] sm:$0xf]
  %v80 = vld [vmem:[%s1 + $0xc8] sm:$0xf]
  %v81 = vld [vmem:[%s1 + $0xcc] sm:$0xf]
  %v82 = vld [vmem:[%s1 + $0xd0] sm:$0xf]
  %v83 = vld [vmem:[%s1 + $0xd4] sm:$0xf]
  %v84 = vld [vmem:[%s1 + $0xd8] sm:$0xf]
  %v85 = vld [vmem:[%s1 + $0xdc] sm:$0xf]
  %v86 = vld [vmem:[%s1 + $0xe0] sm:$0xf]
  %v87 = vld [vmem:[%s1 + $0xe4] sm:$0xf]
  %v88 = vld [vmem:[%s1 + $0xe8] sm:$0xf]
  %v89 = vld [vmem:[%s1 + $0xec] sm:$0xf]
  %v90 = vld [vmem:[%s1 + $0xf0] sm:$0xf]
  %v91 = vld [vmem:[%s1 + $0xf4] sm:$0xf]
  %v92 = vld [vmem:[%s1 + $0xf8] sm:$0xf]
  %v93 = vld [vmem:[%s1 + $0xfc] sm:$0xf]
  %v94 = vld [vmem:[%s1 + $0x100] sm:$0xf]
  %v95 = vld [vmem:[%s1 + $0x104] sm:$0xf]
  %v96 = vld [vmem:[%s1 + $0x108] sm:$0xf]
  %v97 = vld [vmem:[%s1 + $0x10c] sm:$0xf]
  %v98 = vld [vmem:[%s1 + $0x110] sm:$0xf]
  %v99 = vld [vmem:[%s1 + $0x114] sm:$0xf]
  %v100 = vld [vmem:[%s1 + $0x118] sm:$0xf]
  %v101 = vld [vmem:[%s1 + $0x11c] sm:$0xf]
  %v114 = vunpack.c.l.b16 %v18
  %v115 = vunpack.c.h.b16 %v18
  %v116 = vunpack.c.l.b16 %v19
  %v117 = vunpack.c.h.b16 %v19
  %v118 = vunpack.c.l.b16 %v20
  %v119 = vunpack.c.l.b16 %v21
  %v120 = vunpack.c.h.b16 %v21
  %v121 = vunpack.c.l.b16 %v22
  %v122 = vunpack.c.h.b16 %v22
  %v123 = vunpack.c.l.b16 %v23
  %v124 = vunpack.c.l.b16 %v24
  %v125 = vunpack.c.h.b16 %v24
  %v126 = vunpack.c.l.b16 %v25
  %v127 = vunpack.c.h.b16 %v25
  %v128 = vunpack.c.l.b16 %v26
  %v129 = vunpack.c.l.b16 %v27
  %v130 = vunpack.c.h.b16 %v27
  %v131 = vunpack.c.l.b16 %v28
  %v132 = vunpack.c.h.b16 %v28
  %v133 = vunpack.c.l.b16 %v29
  %v134 = vpack.c.b16 %v119, %v114
  %v135 = vpack.c.b16 %v120, %v115
  %v136 = vpack.c.b16 %v121, %v116
  %v137 = vpack.c.b16 %v122, %v117
  %v138 = vpack.c.b16 %v123, %v118
  %v139 = vpack.c.b16 %v129, %v124
  %v140 = vpack.c.b16 %v130, %v125
  %v141 = vpack.c.b16 %v131, %v126
  %v142 = vpack.c.b16 %v132, %v127
  %v143 = vpack.c.b16 %v133, %v128
  %v224 = vunpack.c.l.b16 %v30
  %v225 = vunpack.c.l.b16 %v31
  %v226 = vunpack.c.l.b16 %v32
  %v227 = vunpack.c.l.b16 %v33
  %v228 = vunpack.c.l.b16 %v34
  %v229 = vunpack.c.l.b16 %v35
  %v230 = vunpack.c.l.b16 %v36
  %v231 = vunpack.c.l.b16 %v37
  %v232 = vunpack.c.l.b16 %v38
  %v233 = vunpack.c.l.b16 %v39
  %v234 = vunpack.c.l.b16 %v40
  %v235 = vunpack.c.l.b16 %v41
  %v236 = vunpack.c.l.b16 %v42
  %v237 = vunpack.c.l.b16 %v43
  %v238 = vunpack.c.l.b16 %v44
  %v239 = vunpack.c.l.b16 %v45
  %v240 = vunpack.c.l.b16 %v46
  %v241 = vunpack.c.l.b16 %v47
  %v242 = vunpack.c.l.b16 %v48
  %v243 = vunpack.c.l.b16 %v49
  %v244 = vunpack.c.l.b16 %v50
  %v245 = vunpack.c.l.b16 %v51
  %v246 = vunpack.c.l.b16 %v52
  %v247 = vunpack.c.l.b16 %v53
  %v248 = vunpack.c.l.b16 %v54
  %v249 = vunpack.c.l.b16 %v55
  %v250 = vunpack.c.l.b16 %v56
  %v251 = vunpack.c.l.b16 %v57
  %v252 = vunpack.c.l.b16 %v58
  %v253 = vunpack.c.l.b16 %v59
  %v254 = vunpack.c.l.b16 %v60
  %v255 = vunpack.c.l.b16 %v61
  %v256 = vunpack.c.l.b16 %v62
  %v257 = vunpack.c.l.b16 %v63
  %v258 = vunpack.c.l.b16 %v64
  %v259 = vunpack.c.l.b16 %v65
  %v260 = vunpack.c.l.b16 %v66
  %v261 = vunpack.c.l.b16 %v67
  %v262 = vunpack.c.l.b16 %v68
  %v263 = vunpack.c.l.b16 %v69
  %v264 = vunpack.c.l.b16 %v70
  %v265 = vunpack.c.l.b16 %v71
  %v266 = vunpack.c.l.b16 %v72
  %v267 = vunpack.c.l.b16 %v73
  %v268 = vunpack.c.l.b16 %v74
  %v269 = vunpack.c.l.b16 %v75
  %v270 = vunpack.c.l.b16 %v76
  %v271 = vunpack.c.l.b16 %v77
  %v272 = vunpack.c.l.b16 %v78
  %v273 = vunpack.c.l.b16 %v79
  %v274 = vunpack.c.l.b16 %v80
  %v275 = vunpack.c.l.b16 %v81
  %v276 = vunpack.c.l.b16 %v82
  %v277 = vunpack.c.l.b16 %v83
  %v278 = vunpack.c.l.b16 %v84
  %v279 = vunpack.c.l.b16 %v85
  %v280 = vunpack.c.l.b16 %v86
  %v281 = vunpack.c.l.b16 %v87
  %v282 = vunpack.c.l.b16 %v88
  %v283 = vunpack.c.l.b16 %v89
  %v284 = vunpack.c.l.b16 %v90
  %v285 = vunpack.c.l.b16 %v91
  %v286 = vunpack.c.l.b16 %v92
  %v287 = vunpack.c.l.b16 %v93
  %v288 = vunpack.c.l.b16 %v94
  %v289 = vunpack.c.l.b16 %v95
  %v290 = vunpack.c.l.b16 %v96
  %v291 = vunpack.c.l.b16 %v97
  %v292 = vunpack.c.l.b16 %v98
  %v293 = vunpack.c.l.b16 %v99
  %v294 = vunpack.c.l.b16 %v100
  %v295 = vunpack.c.l.b16 %v101
  %v296 = vpack.c.b16 %v225, %v224
  %v297 = vpack.c.b16 %v227, %v226
  %v298 = vpack.c.b16 %v229, %v228
  %v299 = vpack.c.b16 %v231, %v230
  %v300 = vpack.c.b16 %v233, %v232
  %v301 = vpack.c.b16 %v235, %v234
  %v302 = vpack.c.b16 %v237, %v236
  %v303 = vpack.c.b16 %v239, %v238
  %v304 = vpack.c.b16 %v241, %v240
  %v305 = vpack.c.b16 %v243, %v242
  %v306 = vpack.c.b16 %v245, %v244
  %v307 = vpack.c.b16 %v247, %v246
  %v308 = vpack.c.b16 %v249, %v248
  %v309 = vpack.c.b16 %v251, %v250
  %v310 = vpack.c.b16 %v253, %v252
  %v311 = vpack.c.b16 %v255, %v254
  %v312 = vpack.c.b16 %v257, %v256
  %v313 = vpack.c.b16 %v259, %v258
  %v314 = vpack.c.b16 %v261, %v260
  %v315 = vpack.c.b16 %v263, %v262
  %v316 = vpack.c.b16 %v265, %v264
  %v317 = vpack.c.b16 %v267, %v266
  %v318 = vpack.c.b16 %v269, %v268
  %v319 = vpack.c.b16 %v271, %v270
  %v320 = vpack.c.b16 %v273, %v272
  %v321 = vpack.c.b16 %v275, %v274
  %v322 = vpack.c.b16 %v277, %v276
  %v323 = vpack.c.b16 %v279, %v278
  %v324 = vpack.c.b16 %v281, %v280
  %v325 = vpack.c.b16 %v283, %v282
  %v326 = vpack.c.b16 %v285, %v284
  %v327 = vpack.c.b16 %v287, %v286
  %v328 = vpack.c.b16 %v289, %v288
  %v329 = vpack.c.b16 %v291, %v290
  %v330 = vpack.c.b16 %v293, %v292
  %v331 = vpack.c.b16 %v295, %v294
  %vm368 = vcmask 523264
  %v370 = vsel %vm368, %v138, 0
  %v373 = vsel %vm368, %v143, 0
  %375 = vmatprep.subr.bf16.mxu0 0
  %376 = vmatpush1.bf16.msra.mxu0 %v303
  %377 = vmatprep.subr.bf16.mxu0 0
  %378 = vmatpush1.bf16.msra.mxu0 %v302
  %379 = vmatprep.subr.bf16.mxu0 0
  %380 = vmatpush1.bf16.msra.mxu0 %v301
  %381 = vmatprep.subr.bf16.mxu0 0
  %382 = vmatpush1.bf16.msra.mxu0 %v300
  %383 = vmatprep.subr.bf16.mxu0 0
  %384 = vmatpush1.bf16.msra.mxu0 %v299
  %385 = vmatprep.subr.bf16.mxu0 0
  %386 = vmatpush1.bf16.msra.mxu0 %v298
  %387 = vmatprep.subr.bf16.mxu0 0
  %388 = vmatpush1.bf16.msra.mxu0 %v297
  %389 = vmatprep.subr.bf16.mxu0 0
  %390 = vmatpush1.bf16.msra.mxu0 %v296
  %391 = vmatprep.subr.bf16.mxu0 0
  %392 = vmatpush2.bf16.msra.mxu0 %v311
  %393 = vmatprep.subr.bf16.mxu0 0
  %394 = vmatpush2.bf16.msra.mxu0 %v310
  %395 = vmatprep.subr.bf16.mxu0 0
  %396 = vmatpush2.bf16.msra.mxu0 %v309
  %397 = vmatprep.subr.bf16.mxu0 0
  %398 = vmatpush2.bf16.msra.mxu0 %v308
  %399 = vmatprep.subr.bf16.mxu0 0
  %400 = vmatpush2.bf16.msra.mxu0 %v307
  %401 = vmatprep.subr.bf16.mxu0 0
  %402 = vmatpush2.bf16.msra.mxu0 %v306
  %403 = vmatprep.subr.bf16.mxu0 0
  %404 = vmatpush2.bf16.msra.mxu0 %v305
  %405 = vmatprep.subr.bf16.mxu0 0
  %406 = vmatpush2.bf16.msra.mxu0 %v304
  %407 = vmatprep.mubr.bf16.mxu0 %v135
  %408 = vmatmul.mubr.bf16.gmra.mxu0 %v134
  %v409 = vpop.f32.mrf.mxu0
  %v410 = vadd.f32 0.0, %v409
  %v411 = vpop.f32.mrf.mxu0
  %v412 = vpop.f32.mrf.mxu0
  %v413 = vadd.f32 0.0, %v412
  %v414 = vpop.f32.mrf.mxu0
  %415 = vmatprep.mubr.bf16.mxu0 %v140
  %416 = vmatmul.mubr.bf16.gmra.mxu0 %v139
  %v417 = vpop.f32.mrf.mxu0
  %v418 = vadd.f32 0.0, %v417
  %v419 = vpop.f32.mrf.mxu0
  %v420 = vpop.f32.mrf.mxu0
  %v421 = vadd.f32 0.0, %v420
  %v422 = vpop.f32.mrf.mxu0
  %423 = vdwg.mxu0
  %424 = vmatprep.subr.bf16.mxu0 0
  %425 = vmatpush1.bf16.msra.mxu0 %v319
  %426 = vmatprep.subr.bf16.mxu0 0
  %427 = vmatpush1.bf16.msra.mxu0 %v318
  %428 = vmatprep.subr.bf16.mxu0 0
  %429 = vmatpush1.bf16.msra.mxu0 %v317
  %430 = vmatprep.subr.bf16.mxu0 0
  %431 = vmatpush1.bf16.msra.mxu0 %v316
  %432 = vmatprep.subr.bf16.mxu0 0
  %433 = vmatpush1.bf16.msra.mxu0 %v315
  %434 = vmatprep.subr.bf16.mxu0 0
  %435 = vmatpush1.bf16.msra.mxu0 %v314
  %436 = vmatprep.subr.bf16.mxu0 0
  %437 = vmatpush1.bf16.msra.mxu0 %v313
  %438 = vmatprep.subr.bf16.mxu0 0
  %439 = vmatpush1.bf16.msra.mxu0 %v312
  %440 = vmatprep.subr.bf16.mxu0 0
  %441 = vmatpush2.bf16.msra.mxu0 %v327
  %442 = vmatprep.subr.bf16.mxu0 0
  %443 = vmatpush2.bf16.msra.mxu0 %v326
  %444 = vmatprep.subr.bf16.mxu0 0
  %445 = vmatpush2.bf16.msra.mxu0 %v325
  %446 = vmatprep.subr.bf16.mxu0 0
  %447 = vmatpush2.bf16.msra.mxu0 %v324
  %448 = vmatprep.subr.bf16.mxu0 0
  %449 = vmatpush2.bf16.msra.mxu0 %v323
  %450 = vmatprep.subr.bf16.mxu0 0
  %451 = vmatpush2.bf16.msra.mxu0 %v322
  %452 = vmatprep.subr.bf16.mxu0 0
  %453 = vmatpush2.bf16.msra.mxu0 %v321
  %454 = vmatprep.subr.bf16.mxu0 0
  %455 = vmatpush2.bf16.msra.mxu0 %v320
  %456 = vmatprep.mubr.bf16.mxu0 %v137
  %457 = vmatmul.mubr.bf16.gmra.mxu0 %v136
  %v458 = vpop.f32.mrf.mxu0
  %v459 = vadd.f32 %v410, %v458
  %v460 = vpop.f32.mrf.mxu0
  %v461 = vpop.f32.mrf.mxu0
  %v462 = vadd.f32 %v413, %v461
  %v463 = vpop.f32.mrf.mxu0
  %464 = vmatprep.mubr.bf16.mxu0 %v142
  %465 = vmatmul.mubr.bf16.gmra.mxu0 %v141
  %v466 = vpop.f32.mrf.mxu0
  %v467 = vadd.f32 %v418, %v466
  %v468 = vpop.f32.mrf.mxu0
  %v469 = vpop.f32.mrf.mxu0
  %v470 = vadd.f32 %v421, %v469
  %v471 = vpop.f32.mrf.mxu0
  %472 = vdwg.mxu0
  %473 = vmatprep.subr.bf16.mxu0 0
  %474 = vmatpush1.bf16.msra.mxu0 0
  %475 = vmatprep.subr.bf16.mxu0 0
  %476 = vmatpush1.bf16.msra.mxu0 0
  %477 = vmatprep.subr.bf16.mxu0 0
  %478 = vmatpush1.bf16.msra.mxu0 0
  %479 = vmatprep.subr.bf16.mxu0 0
  %480 = vmatpush1.bf16.msra.mxu0 0
  %481 = vmatprep.subr.bf16.mxu0 0
  %482 = vmatpush1.bf16.msra.mxu0 %v331
  %483 = vmatprep.subr.bf16.mxu0 0
  %484 = vmatpush1.bf16.msra.mxu0 %v330
  %485 = vmatprep.subr.bf16.mxu0 0
  %486 = vmatpush1.bf16.msra.mxu0 %v329
  %487 = vmatprep.subr.bf16.mxu0 0
  %488 = vmatpush1.bf16.msra.mxu0 %v328
  %489 = vmatprep.subr.bf16.mxu0 0
  %490 = vmatpush2.bf16.msra.mxu0 0
  %491 = vmatprep.subr.bf16.mxu0 0
  %492 = vmatpush2.bf16.msra.mxu0 0
  %493 = vmatprep.subr.bf16.mxu0 0
  %494 = vmatpush2.bf16.msra.mxu0 0
  %495 = vmatprep.subr.bf16.mxu0 0
  %496 = vmatpush2.bf16.msra.mxu0 0
  %497 = vmatprep.subr.bf16.mxu0 0
  %498 = vmatpush2.bf16.msra.mxu0 0
  %499 = vmatprep.subr.bf16.mxu0 0
  %500 = vmatpush2.bf16.msra.mxu0 0
  %501 = vmatprep.subr.bf16.mxu0 0
  %502 = vmatpush2.bf16.msra.mxu0 0
  %503 = vmatprep.subr.bf16.mxu0 0
  %504 = vmatpush2.bf16.msra.mxu0 0
  %505 = vmatprep.mubr.bf16.mxu0 0
  %506 = vmatmul.mubr.bf16.gmra.mxu0 %v370
  %v507 = vpop.f32.mrf.mxu0
  %v508 = vadd.f32 %v459, %v507
  %v509 = vpop.f32.mrf.mxu0
  %v510 = vpop.f32.mrf.mxu0
  %v511 = vadd.f32 %v462, %v510
  %v512 = vpop.f32.mrf.mxu0
  %513 = vmatprep.mubr.bf16.mxu0 0
  %514 = vmatmul.mubr.bf16.gmra.mxu0 %v373
  %v515 = vpop.f32.mrf.mxu0
  %v516 = vadd.f32 %v467, %v515
  %v517 = vpop.f32.mrf.mxu0
  %v518 = vpop.f32.mrf.mxu0
  %v519 = vadd.f32 %v470, %v518
  %v520 = vpop.f32.mrf.mxu0
  %521 = vdwg.mxu0
  %v522 = vld [vmem:[%s2] sm:$0x1]
  %v524 = vlaneseq
  %v525 = vshrl.u32 %v524, 7
  %v526 = vsub.s32 0, %v525
  %v527 = vrot.slane %v522, %v526
  %v529 = vmul.f32 %v508, %v527
  %v530 = vmul.f32 %v511, %v527
  %v531 = vmul.f32 %v516, %v527
  %v532 = vmul.f32 %v519, %v527
  %v533 = vld [vmem:[%s3] sm:$0x1]
  %v535 = vlaneseq
  %v536 = vshrl.u32 %v535, 7
  %v537 = vsub.s32 0, %v536
  %v538 = vrot.slane %v533, %v537
  %v540 = vadd.f32 %v529, %v538
  %v541 = vadd.f32 %v530, %v538
  %v542 = vadd.f32 %v531, %v538
  %v543 = vadd.f32 %v532, %v538
  %v544 = vmax.f32 %v540, 0.0
  %v545 = vmax.f32 %v541, 0.0
  %v546 = vmax.f32 %v542, 0.0
  %v547 = vmax.f32 %v543, 0.0
  %548 = vst.msk [vmem:[%s4] sm:$0xff] %vm368, %v544
  %549 = vst.msk [vmem:[%s4 + $0x8] sm:$0xff] %vm368, %v545
  %550 = vst.msk [vmem:[%s4 + $0x10] sm:$0xff] %vm368, %v546
  %551 = vst.msk [vmem:[%s4 + $0x18] sm:$0xff] %vm368, %v547
  // Predicated region
  $region18: #{resnet_encoder_forward.8} parent=0 // pred_check
    _
  $region19: #{resnet_encoder_forward.8} parent=0 // pred_check_branch
    %553 = sbr.rel (0) target = $region21
  $region20: #{resnet_encoder_forward.8} parent=0 // pred_region
    _
  $region21: #{resnet_encoder_forward.8} parent=0 // pred_fallthru
    _
  // Predicated region
  $region22: #{resnet_encoder_forward.8} parent=0 // pred_check
    _
  $region23: #{resnet_encoder_forward.8} parent=0 // pred_check_branch
    %555 = sbr.rel (0) target = $region25
  $region24: #{resnet_encoder_forward.8} parent=0 // pred_region
    _
  $region25: #{resnet_encoder_forward.8} parent=0 // pred_fallthru
    _

// kernel: resnet_encoder_forward.9
$region0: #{resnet_encoder_forward.9}
  #allocation0 [shape = 'u32[]', space=smem, size = 0x4, offset = 0x4, fixed_abs, tag = 'smem constant byte address 0x4 - core index']
  #allocation1 [shape = 'u32[144,128]{1,0:T(1,128)}', space=vmem, size = 0x12000, scoped, tag = 'internal scratch']
  %s0 = inlined_call_operand.vmem [shape: bf16[32,576], index: 0, kind: input, shape index: {}]
  %s1 = inlined_call_operand.vmem [shape: bf16[576,64], index: 1, kind: input, shape index: {}]
  %s2 = inlined_call_operand.vmem [shape: f32[1,64], index: 2, kind: input, shape index: {}]
  %s3 = inlined_call_operand.vmem [shape: f32[1,64], index: 3, kind: input, shape index: {}]
  %s4 = inlined_call_operand.vmem [shape: f32[32,64], index: 4, kind: input, shape index: {}]
  %s5 = inlined_call_operand.vmem [shape: f32[32,64], index: 5, kind: output, shape index: {}]
  %s6 = sld [smem:[#allocation0]]
  $region30: #{resnet_encoder_forward.9} parent=0
    _
  %s8 = ssub.s32 1, %s6
  %s9 = scalar_select 0, %s8, %s6
  // Predicated region
  $region2: #{resnet_encoder_forward.9} parent=0 // pred_check
    _
  $region3: #{resnet_encoder_forward.9} parent=0 // pred_check_branch
    %11 = sbr.rel (0) target = $region5
  $region4: #{resnet_encoder_forward.9} parent=0 // pred_region
    _
  $region5: #{resnet_encoder_forward.9} parent=0 // pred_fallthru
    _
  // Predicated region
  $region6: #{resnet_encoder_forward.9} parent=0 // pred_check
    _
  $region7: #{resnet_encoder_forward.9} parent=0 // pred_check_branch
    %13 = sbr.rel (0) target = $region9
  $region8: #{resnet_encoder_forward.9} parent=0 // pred_region
    _
  $region9: #{resnet_encoder_forward.9} parent=0 // pred_fallthru
    _
  // Predicated region
  $region10: #{resnet_encoder_forward.9} parent=0 // pred_check
    _
  $region11: #{resnet_encoder_forward.9} parent=0 // pred_check_branch
    %15 = sbr.rel (0) target = $region13
  $region12: #{resnet_encoder_forward.9} parent=0 // pred_region
    _
  $region13: #{resnet_encoder_forward.9} parent=0 // pred_fallthru
    _
  // Predicated region
  $region14: #{resnet_encoder_forward.9} parent=0 // pred_check
    _
  $region15: #{resnet_encoder_forward.9} parent=0 // pred_check_branch
    %17 = sbr.rel (0) target = $region17
  $region16: #{resnet_encoder_forward.9} parent=0 // pred_region
    _
  $region17: #{resnet_encoder_forward.9} parent=0 // pred_fallthru
    _
  // Predicated region
  $region18: #{resnet_encoder_forward.9} parent=0 // pred_check
    _
  $region19: #{resnet_encoder_forward.9} parent=0 // pred_check_branch
    %19 = sbr.rel (0) target = $region21
  $region20: #{resnet_encoder_forward.9} parent=0 // pred_region
    _
  $region21: #{resnet_encoder_forward.9} parent=0 // pred_fallthru
    _
  %v21 = vld [vmem:[%s0] sm:$0xff]
  %v22 = vld [vmem:[%s0 + $0x8] sm:$0xff]
  %v23 = vld [vmem:[%s0 + $0x10] sm:$0xf]
  %v24 = vld [vmem:[%s0 + $0x14] sm:$0xff]
  %v25 = vld [vmem:[%s0 + $0x1c] sm:$0xff]
  %v26 = vld [vmem:[%s0 + $0x24] sm:$0xf]
  %v27 = vld [vmem:[%s0 + $0x28] sm:$0xff]
  %v28 = vld [vmem:[%s0 + $0x30] sm:$0xff]
  %v29 = vld [vmem:[%s0 + $0x38] sm:$0xf]
  %v30 = vld [vmem:[%s0 + $0x3c] sm:$0xff]
  %v31 = vld [vmem:[%s0 + $0x44] sm:$0xff]
  %v32 = vld [vmem:[%s0 + $0x4c] sm:$0xf]
  %v33 = vld [vmem:[%s1] sm:$0xf]
  %v34 = vld [vmem:[%s1 + $0x4] sm:$0xf]
  %v35 = vld [vmem:[%s1 + $0x8] sm:$0xf]
  %v36 = vld [vmem:[%s1 + $0xc] sm:$0xf]
  %v37 = vld [vmem:[%s1 + $0x10] sm:$0xf]
  %v38 = vld [vmem:[%s1 + $0x14] sm:$0xf]
  %v39 = vld [vmem:[%s1 + $0x18] sm:$0xf]
  %v40 = vld [vmem:[%s1 + $0x1c] sm:$0xf]
  %v41 = vld [vmem:[%s1 + $0x20] sm:$0xf]
  %v42 = vld [vmem:[%s1 + $0x24] sm:$0xf]
  %v43 = vld [vmem:[%s1 + $0x28] sm:$0xf]
  %v44 = vld [vmem:[%s1 + $0x2c] sm:$0xf]
  %v45 = vld [vmem:[%s1 + $0x30] sm:$0xf]
  %v46 = vld [vmem:[%s1 + $0x34] sm:$0xf]
  %v47 = vld [vmem:[%s1 + $0x38] sm:$0xf]
  %v48 = vld [vmem:[%s1 + $0x3c] sm:$0xf]
  %v49 = vld [vmem:[%s1 + $0x40] sm:$0xf]
  %v50 = vld [vmem:[%s1 + $0x44] sm:$0xf]
  %v51 = vld [vmem:[%s1 + $0x48] sm:$0xf]
  %v52 = vld [vmem:[%s1 + $0x4c] sm:$0xf]
  %v53 = vld [vmem:[%s1 + $0x50] sm:$0xf]
  %v54 = vld [vmem:[%s1 + $0x54] sm:$0xf]
  %v55 = vld [vmem:[%s1 + $0x58] sm:$0xf]
  %v56 = vld [vmem:[%s1 + $0x5c] sm:$0xf]
  %v57 = vld [vmem:[%s1 + $0x60] sm:$0xf]
  %v58 = vld [vmem:[%s1 + $0x64] sm:$0xf]
  %v59 = vld [vmem:[%s1 + $0x68] sm:$0xf]
  %v60 = vld [vmem:[%s1 + $0x6c] sm:$0xf]
  %v61 = vld [vmem:[%s1 + $0x70] sm:$0xf]
  %v62 = vld [vmem:[%s1 + $0x74] sm:$0xf]
  %v63 = vld [vmem:[%s1 + $0x78] sm:$0xf]
  %v64 = vld [vmem:[%s1 + $0x7c] sm:$0xf]
  %v65 = vld [vmem:[%s1 + $0x80] sm:$0xf]
  %v66 = vld [vmem:[%s1 + $0x84] sm:$0xf]
  %v67 = vld [vmem:[%s1 + $0x88] sm:$0xf]
  %v68 = vld [vmem:[%s1 + $0x8c] sm:$0xf]
  %v69 = vld [vmem:[%s1 + $0x90] sm:$0xf]
  %v70 = vld [vmem:[%s1 + $0x94] sm:$0xf]
  %v71 = vld [vmem:[%s1 + $0x98] sm:$0xf]
  %v72 = vld [vmem:[%s1 + $0x9c] sm:$0xf]
  %v73 = vld [vmem:[%s1 + $0xa0] sm:$0xf]
  %v74 = vld [vmem:[%s1 + $0xa4] sm:$0xf]
  %v75 = vld [vmem:[%s1 + $0xa8] sm:$0xf]
  %v76 = vld [vmem:[%s1 + $0xac] sm:$0xf]
  %v77 = vld [vmem:[%s1 + $0xb0] sm:$0xf]
  %v78 = vld [vmem:[%s1 + $0xb4] sm:$0xf]
  %v79 = vld [vmem:[%s1 + $0xb8] sm:$0xf]
  %v80 = vld [vmem:[%s1 + $0xbc] sm:$0xf]
  %v81 = vld [vmem:[%s1 + $0xc0] sm:$0xf]
  %v82 = vld [vmem:[%s1 + $0xc4] sm:$0xf]
  %v83 = vld [vmem:[%s1 + $0xc8] sm:$0xf]
  %v84 = vld [vmem:[%s1 + $0xcc] sm:$0xf]
  %v85 = vld [vmem:[%s1 + $0xd0] sm:$0xf]
  %v86 = vld [vmem:[%s1 + $0xd4] sm:$0xf]
  %v87 = vld [vmem:[%s1 + $0xd8] sm:$0xf]
  %v88 = vld [vmem:[%s1 + $0xdc] sm:$0xf]
  %v89 = vld [vmem:[%s1 + $0xe0] sm:$0xf]
  %v90 = vld [vmem:[%s1 + $0xe4] sm:$0xf]
  %v91 = vld [vmem:[%s1 + $0xe8] sm:$0xf]
  %v92 = vld [vmem:[%s1 + $0xec] sm:$0xf]
  %v93 = vld [vmem:[%s1 + $0xf0] sm:$0xf]
  %v94 = vld [vmem:[%s1 + $0xf4] sm:$0xf]
  %v95 = vld [vmem:[%s1 + $0xf8] sm:$0xf]
  %v96 = vld [vmem:[%s1 + $0xfc] sm:$0xf]
  %v97 = vld [vmem:[%s1 + $0x100] sm:$0xf]
  %v98 = vld [vmem:[%s1 + $0x104] sm:$0xf]
  %v99 = vld [vmem:[%s1 + $0x108] sm:$0xf]
  %v100 = vld [vmem:[%s1 + $0x10c] sm:$0xf]
  %v101 = vld [vmem:[%s1 + $0x110] sm:$0xf]
  %v102 = vld [vmem:[%s1 + $0x114] sm:$0xf]
  %v103 = vld [vmem:[%s1 + $0x118] sm:$0xf]
  %v104 = vld [vmem:[%s1 + $0x11c] sm:$0xf]
  %v117 = vunpack.c.l.b16 %v21
  %v118 = vunpack.c.h.b16 %v21
  %v119 = vunpack.c.l.b16 %v22
  %v120 = vunpack.c.h.b16 %v22
  %v121 = vunpack.c.l.b16 %v23
  %v122 = vunpack.c.l.b16 %v24
  %v123 = vunpack.c.h.b16 %v24
  %v124 = vunpack.c.l.b16 %v25
  %v125 = vunpack.c.h.b16 %v25
  %v126 = vunpack.c.l.b16 %v26
  %v127 = vunpack.c.l.b16 %v27
  %v128 = vunpack.c.h.b16 %v27
  %v129 = vunpack.c.l.b16 %v28
  %v130 = vunpack.c.h.b16 %v28
  %v131 = vunpack.c.l.b16 %v29
  %v132 = vunpack.c.l.b16 %v30
  %v133 = vunpack.c.h.b16 %v30
  %v134 = vunpack.c.l.b16 %v31
  %v135 = vunpack.c.h.b16 %v31
  %v136 = vunpack.c.l.b16 %v32
  %v137 = vpack.c.b16 %v122, %v117
  %v138 = vpack.c.b16 %v123, %v118
  %v139 = vpack.c.b16 %v124, %v119
  %v140 = vpack.c.b16 %v125, %v120
  %v141 = vpack.c.b16 %v126, %v121
  %v142 = vpack.c.b16 %v132, %v127
  %v143 = vpack.c.b16 %v133, %v128
  %v144 = vpack.c.b16 %v134, %v129
  %v145 = vpack.c.b16 %v135, %v130
  %v146 = vpack.c.b16 %v136, %v131
  %v227 = vunpack.c.l.b16 %v33
  %v228 = vunpack.c.l.b16 %v34
  %v229 = vunpack.c.l.b16 %v35
  %v230 = vunpack.c.l.b16 %v36
  %v231 = vunpack.c.l.b16 %v37
  %v232 = vunpack.c.l.b16 %v38
  %v233 = vunpack.c.l.b16 %v39
  %v234 = vunpack.c.l.b16 %v40
  %v235 = vunpack.c.l.b16 %v41
  %v236 = vunpack.c.l.b16 %v42
  %v237 = vunpack.c.l.b16 %v43
  %v238 = vunpack.c.l.b16 %v44
  %v239 = vunpack.c.l.b16 %v45
  %v240 = vunpack.c.l.b16 %v46
  %v241 = vunpack.c.l.b16 %v47
  %v242 = vunpack.c.l.b16 %v48
  %v243 = vunpack.c.l.b16 %v49
  %v244 = vunpack.c.l.b16 %v50
  %v245 = vunpack.c.l.b16 %v51
  %v246 = vunpack.c.l.b16 %v52
  %v247 = vunpack.c.l.b16 %v53
  %v248 = vunpack.c.l.b16 %v54
  %v249 = vunpack.c.l.b16 %v55
  %v250 = vunpack.c.l.b16 %v56
  %v251 = vunpack.c.l.b16 %v57
  %v252 = vunpack.c.l.b16 %v58
  %v253 = vunpack.c.l.b16 %v59
  %v254 = vunpack.c.l.b16 %v60
  %v255 = vunpack.c.l.b16 %v61
  %v256 = vunpack.c.l.b16 %v62
  %v257 = vunpack.c.l.b16 %v63
  %v258 = vunpack.c.l.b16 %v64
  %v259 = vunpack.c.l.b16 %v65
  %v260 = vunpack.c.l.b16 %v66
  %v261 = vunpack.c.l.b16 %v67
  %v262 = vunpack.c.l.b16 %v68
  %v263 = vunpack.c.l.b16 %v69
  %v264 = vunpack.c.l.b16 %v70
  %v265 = vunpack.c.l.b16 %v71
  %v266 = vunpack.c.l.b16 %v72
  %v267 = vunpack.c.l.b16 %v73
  %v268 = vunpack.c.l.b16 %v74
  %v269 = vunpack.c.l.b16 %v75
  %v270 = vunpack.c.l.b16 %v76
  %v271 = vunpack.c.l.b16 %v77
  %v272 = vunpack.c.l.b16 %v78
  %v273 = vunpack.c.l.b16 %v79
  %v274 = vunpack.c.l.b16 %v80
  %v275 = vunpack.c.l.b16 %v81
  %v276 = vunpack.c.l.b16 %v82
  %v277 = vunpack.c.l.b16 %v83
  %v278 = vunpack.c.l.b16 %v84
  %v279 = vunpack.c.l.b16 %v85
  %v280 = vunpack.c.l.b16 %v86
  %v281 = vunpack.c.l.b16 %v87
  %v282 = vunpack.c.l.b16 %v88
  %v283 = vunpack.c.l.b16 %v89
  %v284 = vunpack.c.l.b16 %v90
  %v285 = vunpack.c.l.b16 %v91
  %v286 = vunpack.c.l.b16 %v92
  %v287 = vunpack.c.l.b16 %v93
  %v288 = vunpack.c.l.b16 %v94
  %v289 = vunpack.c.l.b16 %v95
  %v290 = vunpack.c.l.b16 %v96
  %v291 = vunpack.c.l.b16 %v97
  %v292 = vunpack.c.l.b16 %v98
  %v293 = vunpack.c.l.b16 %v99
  %v294 = vunpack.c.l.b16 %v100
  %v295 = vunpack.c.l.b16 %v101
  %v296 = vunpack.c.l.b16 %v102
  %v297 = vunpack.c.l.b16 %v103
  %v298 = vunpack.c.l.b16 %v104
  %v299 = vpack.c.b16 %v228, %v227
  %v300 = vpack.c.b16 %v230, %v229
  %v301 = vpack.c.b16 %v232, %v231
  %v302 = vpack.c.b16 %v234, %v233
  %v303 = vpack.c.b16 %v236, %v235
  %v304 = vpack.c.b16 %v238, %v237
  %v305 = vpack.c.b16 %v240, %v239
  %v306 = vpack.c.b16 %v242, %v241
  %v307 = vpack.c.b16 %v244, %v243
  %v308 = vpack.c.b16 %v246, %v245
  %v309 = vpack.c.b16 %v248, %v247
  %v310 = vpack.c.b16 %v250, %v249
  %v311 = vpack.c.b16 %v252, %v251
  %v312 = vpack.c.b16 %v254, %v253
  %v313 = vpack.c.b16 %v256, %v255
  %v314 = vpack.c.b16 %v258, %v257
  %v315 = vpack.c.b16 %v260, %v259
  %v316 = vpack.c.b16 %v262, %v261
  %v317 = vpack.c.b16 %v264, %v263
  %v318 = vpack.c.b16 %v266, %v265
  %v319 = vpack.c.b16 %v268, %v267
  %v320 = vpack.c.b16 %v270, %v269
  %v321 = vpack.c.b16 %v272, %v271
  %v322 = vpack.c.b16 %v274, %v273
  %v323 = vpack.c.b16 %v276, %v275
  %v324 = vpack.c.b16 %v278, %v277
  %v325 = vpack.c.b16 %v280, %v279
  %v326 = vpack.c.b16 %v282, %v281
  %v327 = vpack.c.b16 %v284, %v283
  %v328 = vpack.c.b16 %v286, %v285
  %v329 = vpack.c.b16 %v288, %v287
  %v330 = vpack.c.b16 %v290, %v289
  %v331 = vpack.c.b16 %v292, %v291
  %v332 = vpack.c.b16 %v294, %v293
  %v333 = vpack.c.b16 %v296, %v295
  %v334 = vpack.c.b16 %v298, %v297
  %vm371 = vcmask 523264
  %v373 = vsel %vm371, %v141, 0
  %v376 = vsel %vm371, %v146, 0
  %378 = vmatprep.subr.bf16.mxu0 0
  %379 = vmatpush1.bf16.msra.mxu0 %v306
  %380 = vmatprep.subr.bf16.mxu0 0
  %381 = vmatpush1.bf16.msra.mxu0 %v305
  %382 = vmatprep.subr.bf16.mxu0 0
  %383 = vmatpush1.bf16.msra.mxu0 %v304
  %384 = vmatprep.subr.bf16.mxu0 0
  %385 = vmatpush1.bf16.msra.mxu0 %v303
  %386 = vmatprep.subr.bf16.mxu0 0
  %387 = vmatpush1.bf16.msra.mxu0 %v302
  %388 = vmatprep.subr.bf16.mxu0 0
  %389 = vmatpush1.bf16.msra.mxu0 %v301
  %390 = vmatprep.subr.bf16.mxu0 0
  %391 = vmatpush1.bf16.msra.mxu0 %v300
  %392 = vmatprep.subr.bf16.mxu0 0
  %393 = vmatpush1.bf16.msra.mxu0 %v299
  %394 = vmatprep.subr.bf16.mxu0 0
  %395 = vmatpush2.bf16.msra.mxu0 %v314
  %396 = vmatprep.subr.bf16.mxu0 0
  %397 = vmatpush2.bf16.msra.mxu0 %v313
  %398 = vmatprep.subr.bf16.mxu0 0
  %399 = vmatpush2.bf16.msra.mxu0 %v312
  %400 = vmatprep.subr.bf16.mxu0 0
  %401 = vmatpush2.bf16.msra.mxu0 %v311
  %402 = vmatprep.subr.bf16.mxu0 0
  %403 = vmatpush2.bf16.msra.mxu0 %v310
  %404 = vmatprep.subr.bf16.mxu0 0
  %405 = vmatpush2.bf16.msra.mxu0 %v309
  %406 = vmatprep.subr.bf16.mxu0 0
  %407 = vmatpush2.bf16.msra.mxu0 %v308
  %408 = vmatprep.subr.bf16.mxu0 0
  %409 = vmatpush2.bf16.msra.mxu0 %v307
  %410 = vmatprep.mubr.bf16.mxu0 %v138
  %411 = vmatmul.mubr.bf16.gmra.mxu0 %v137
  %v412 = vpop.f32.mrf.mxu0
  %v413 = vadd.f32 0.0, %v412
  %v414 = vpop.f32.mrf.mxu0
  %v415 = vpop.f32.mrf.mxu0
  %v416 = vadd.f32 0.0, %v415
  %v417 = vpop.f32.mrf.mxu0
  %418 = vmatprep.mubr.bf16.mxu0 %v143
  %419 = vmatmul.mubr.bf16.gmra.mxu0 %v142
  %v420 = vpop.f32.mrf.mxu0
  %v421 = vadd.f32 0.0, %v420
  %v422 = vpop.f32.mrf.mxu0
  %v423 = vpop.f32.mrf.mxu0
  %v424 = vadd.f32 0.0, %v423
  %v425 = vpop.f32.mrf.mxu0
  %426 = vdwg.mxu0
  %427 = vmatprep.subr.bf16.mxu0 0
  %428 = vmatpush1.bf16.msra.mxu0 %v322
  %429 = vmatprep.subr.bf16.mxu0 0
  %430 = vmatpush1.bf16.msra.mxu0 %v321
  %431 = vmatprep.subr.bf16.mxu0 0
  %432 = vmatpush1.bf16.msra.mxu0 %v320
  %433 = vmatprep.subr.bf16.mxu0 0
  %434 = vmatpush1.bf16.msra.mxu0 %v319
  %435 = vmatprep.subr.bf16.mxu0 0
  %436 = vmatpush1.bf16.msra.mxu0 %v318
  %437 = vmatprep.subr.bf16.mxu0 0
  %438 = vmatpush1.bf16.msra.mxu0 %v317
  %439 = vmatprep.subr.bf16.mxu0 0
  %440 = vmatpush1.bf16.msra.mxu0 %v316
  %441 = vmatprep.subr.bf16.mxu0 0
  %442 = vmatpush1.bf16.msra.mxu0 %v315
  %443 = vmatprep.subr.bf16.mxu0 0
  %444 = vmatpush2.bf16.msra.mxu0 %v330
  %445 = vmatprep.subr.bf16.mxu0 0
  %446 = vmatpush2.bf16.msra.mxu0 %v329
  %447 = vmatprep.subr.bf16.mxu0 0
  %448 = vmatpush2.bf16.msra.mxu0 %v328
  %449 = vmatprep.subr.bf16.mxu0 0
  %450 = vmatpush2.bf16.msra.mxu0 %v327
  %451 = vmatprep.subr.bf16.mxu0 0
  %452 = vmatpush2.bf16.msra.mxu0 %v326
  %453 = vmatprep.subr.bf16.mxu0 0
  %454 = vmatpush2.bf16.msra.mxu0 %v325
  %455 = vmatprep.subr.bf16.mxu0 0
  %456 = vmatpush2.bf16.msra.mxu0 %v324
  %457 = vmatprep.subr.bf16.mxu0 0
  %458 = vmatpush2.bf16.msra.mxu0 %v323
  %459 = vmatprep.mubr.bf16.mxu0 %v140
  %460 = vmatmul.mubr.bf16.gmra.mxu0 %v139
  %v461 = vpop.f32.mrf.mxu0
  %v462 = vadd.f32 %v413, %v461
  %v463 = vpop.f32.mrf.mxu0
  %v464 = vpop.f32.mrf.mxu0
  %v465 = vadd.f32 %v416, %v464
  %v466 = vpop.f32.mrf.mxu0
  %467 = vmatprep.mubr.bf16.mxu0 %v145
  %468 = vmatmul.mubr.bf16.gmra.mxu0 %v144
  %v469 = vpop.f32.mrf.mxu0
  %v470 = vadd.f32 %v421, %v469
  %v471 = vpop.f32.mrf.mxu0
  %v472 = vpop.f32.mrf.mxu0
  %v473 = vadd.f32 %v424, %v472
  %v474 = vpop.f32.mrf.mxu0
  %475 = vdwg.mxu0
  %476 = vmatprep.subr.bf16.mxu0 0
  %477 = vmatpush1.bf16.msra.mxu0 0
  %478 = vmatprep.subr.bf16.mxu0 0
  %479 = vmatpush1.bf16.msra.mxu0 0
  %480 = vmatprep.subr.bf16.mxu0 0
  %481 = vmatpush1.bf16.msra.mxu0 0
  %482 = vmatprep.subr.bf16.mxu0 0
  %483 = vmatpush1.bf16.msra.mxu0 0
  %484 = vmatprep.subr.bf16.mxu0 0
  %485 = vmatpush1.bf16.msra.mxu0 %v334
  %486 = vmatprep.subr.bf16.mxu0 0
  %487 = vmatpush1.bf16.msra.mxu0 %v333
  %488 = vmatprep.subr.bf16.mxu0 0
  %489 = vmatpush1.bf16.msra.mxu0 %v332
  %490 = vmatprep.subr.bf16.mxu0 0
  %491 = vmatpush1.bf16.msra.mxu0 %v331
  %492 = vmatprep.subr.bf16.mxu0 0
  %493 = vmatpush2.bf16.msra.mxu0 0
  %494 = vmatprep.subr.bf16.mxu0 0
  %495 = vmatpush2.bf16.msra.mxu0 0
  %496 = vmatprep.subr.bf16.mxu0 0
  %497 = vmatpush2.bf16.msra.mxu0 0
  %498 = vmatprep.subr.bf16.mxu0 0
  %499 = vmatpush2.bf16.msra.mxu0 0
  %500 = vmatprep.subr.bf16.mxu0 0
  %501 = vmatpush2.bf16.msra.mxu0 0
  %502 = vmatprep.subr.bf16.mxu0 0
  %503 = vmatpush2.bf16.msra.mxu0 0
  %504 = vmatprep.subr.bf16.mxu0 0
  %505 = vmatpush2.bf16.msra.mxu0 0
  %506 = vmatprep.subr.bf16.mxu0 0
  %507 = vmatpush2.bf16.msra.mxu0 0
  %508 = vmatprep.mubr.bf16.mxu0 0
  %509 = vmatmul.mubr.bf16.gmra.mxu0 %v373
  %v510 = vpop.f32.mrf.mxu0
  %v511 = vadd.f32 %v462, %v510
  %v512 = vpop.f32.mrf.mxu0
  %v513 = vpop.f32.mrf.mxu0
  %v514 = vadd.f32 %v465, %v513
  %v515 = vpop.f32.mrf.mxu0
  %516 = vmatprep.mubr.bf16.mxu0 0
  %517 = vmatmul.mubr.bf16.gmra.mxu0 %v376
  %v518 = vpop.f32.mrf.mxu0
  %v519 = vadd.f32 %v470, %v518
  %v520 = vpop.f32.mrf.mxu0
  %v521 = vpop.f32.mrf.mxu0
  %v522 = vadd.f32 %v473, %v521
  %v523 = vpop.f32.mrf.mxu0
  %524 = vdwg.mxu0
  %v525 = vld [vmem:[%s2] sm:$0x1]
  %v527 = vlaneseq
  %v528 = vshrl.u32 %v527, 7
  %v529 = vsub.s32 0, %v528
  %v530 = vrot.slane %v525, %v529
  %v532 = vmul.f32 %v511, %v530
  %v533 = vmul.f32 %v514, %v530
  %v534 = vmul.f32 %v519, %v530
  %v535 = vmul.f32 %v522, %v530
  %v536 = vld [vmem:[%s3] sm:$0x1]
  %v538 = vlaneseq
  %v539 = vshrl.u32 %v538, 7
  %v540 = vsub.s32 0, %v539
  %v541 = vrot.slane %v536, %v540
  %v543 = vadd.f32 %v532, %v541
  %v544 = vadd.f32 %v533, %v541
  %v545 = vadd.f32 %v534, %v541
  %v546 = vadd.f32 %v535, %v541
  %v547 = vld [vmem:[%s4] sm:$0xff]
  %v548 = vld [vmem:[%s4 + $0x8] sm:$0xff]
  %v549 = vld [vmem:[%s4 + $0x10] sm:$0xff]
  %v550 = vld [vmem:[%s4 + $0x18] sm:$0xff]
  %v551 = vadd.f32 %v543, %v547
  %v552 = vadd.f32 %v544, %v548
  %v553 = vadd.f32 %v545, %v549
  %v554 = vadd.f32 %v546, %v550
  %v555 = vmax.f32 %v551, 0.0
  %v556 = vmax.f32 %v552, 0.0
  %v557 = vmax.f32 %v553, 0.0
  %v558 = vmax.f32 %v554, 0.0
  %559 = vst.msk [vmem:[%s5] sm:$0xff] %vm371, %v555
  %560 = vst.msk [vmem:[%s5 + $0x8] sm:$0xff] %vm371, %v556
  %561 = vst.msk [vmem:[%s5 + $0x10] sm:$0xff] %vm371, %v557
  %562 = vst.msk [vmem:[%s5 + $0x18] sm:$0xff] %vm371, %v558
  // Predicated region
  $region22: #{resnet_encoder_forward.9} parent=0 // pred_check
    _
  $region23: #{resnet_encoder_forward.9} parent=0 // pred_check_branch
    %564 = sbr.rel (0) target = $region25
  $region24: #{resnet_encoder_forward.9} parent=0 // pred_region
    _
  $region25: #{resnet_encoder_forward.9} parent=0 // pred_fallthru
    _
  // Predicated region
  $region26: #{resnet_encoder_forward.9} parent=0 // pred_check
    _
  $region27: #{resnet_encoder_forward.9} parent=0 // pred_check_branch
    %566 = sbr.rel (0) target = $region29
  $region28: #{resnet_encoder_forward.9} parent=0 // pred_region
    _
  $region29: #{resnet_encoder_forward.9} parent=0 // pred_fallthru
    _

// kernel: resnet_encoder_forward.11
$region0: #{resnet_encoder_forward.11}
  #allocation0 [shape = 'u32[]', space=smem, size = 0x4, offset = 0x4, fixed_abs, tag = 'smem constant byte address 0x4 - core index']
  #allocation1 [shape = 'u32[144,128]{1,0:T(1,128)}', space=vmem, size = 0x12000, scoped, tag = 'internal scratch']
  %s0 = inlined_call_operand.vmem [shape: bf16[32,576], index: 0, kind: input, shape index: {}]
  %s1 = inlined_call_operand.vmem [shape: bf16[576,64], index: 1, kind: input, shape index: {}]
  %s2 = inlined_call_operand.vmem [shape: f32[1,64], index: 2, kind: input, shape index: {}]
  %s3 = inlined_call_operand.vmem [shape: f32[1,64], index: 3, kind: input, shape index: {}]
  %s4 = inlined_call_operand.vmem [shape: f32[32,64], index: 4, kind: input, shape index: {}]
  %s5 = inlined_call_operand.hbm [shape: f32[32,64], index: 5, kind: output, shape index: {}]
  %s6 = sld [smem:[#allocation0]]
  $region30: #{resnet_encoder_forward.11} parent=0
    _
  %s8 = ssub.s32 1, %s6
  %s9 = scalar_select 0, %s8, %s6
  $region1: #{resnet_encoder_forward.11} parent=0
    #allocation2 [shape = 'u8[16384]{0}', space=vmem, size = 0x4000, scoped, tag = 'output window, operand 0, single buffered']
    #allocation3 [shape = 's32[1]{0}', space=sflag, size = 0x4, scoped, tag = 'scoped memory for resnet_encoder_forward.11']
    %10 = vsyncpa [#allocation3], 0
    // Predicated region
    $region2: #{resnet_encoder_forward.11} parent=1 // pred_check
      _
    $region3: #{resnet_encoder_forward.11} parent=1 // pred_check_branch
      %12 = sbr.rel (0) target = $region5
    $region4: #{resnet_encoder_forward.11} parent=1 // pred_region
      _
    $region5: #{resnet_encoder_forward.11} parent=1 // pred_fallthru
      _
    // Predicated region
    $region6: #{resnet_encoder_forward.11} parent=1 // pred_check
      _
    $region7: #{resnet_encoder_forward.11} parent=1 // pred_check_branch
      %14 = sbr.rel (0) target = $region9
    $region8: #{resnet_encoder_forward.11} parent=1 // pred_region
      _
    $region9: #{resnet_encoder_forward.11} parent=1 // pred_fallthru
      _
    // Predicated region
    $region10: #{resnet_encoder_forward.11} parent=1 // pred_check
      _
    $region11: #{resnet_encoder_forward.11} parent=1 // pred_check_branch
      %16 = sbr.rel (0) target = $region13
    $region12: #{resnet_encoder_forward.11} parent=1 // pred_region
      _
    $region13: #{resnet_encoder_forward.11} parent=1 // pred_fallthru
      _
    // Predicated region
    $region14: #{resnet_encoder_forward.11} parent=1 // pred_check
      _
    $region15: #{resnet_encoder_forward.11} parent=1 // pred_check_branch
      %18 = sbr.rel (0) target = $region17
    $region16: #{resnet_encoder_forward.11} parent=1 // pred_region
      _
    $region17: #{resnet_encoder_forward.11} parent=1 // pred_fallthru
      _
    // Predicated region
    $region18: #{resnet_encoder_forward.11} parent=1 // pred_check
      _
    $region19: #{resnet_encoder_forward.11} parent=1 // pred_check_branch
      %20 = sbr.rel (0) target = $region21
    $region20: #{resnet_encoder_forward.11} parent=1 // pred_region
      _
    $region21: #{resnet_encoder_forward.11} parent=1 // pred_fallthru
      _
    %v22 = vld [vmem:[%s0] sm:$0xff]
    %v23 = vld [vmem:[%s0 + $0x8] sm:$0xff]
    %v24 = vld [vmem:[%s0 + $0x10] sm:$0xf]
    %v25 = vld [vmem:[%s0 + $0x14] sm:$0xff]
    %v26 = vld [vmem:[%s0 + $0x1c] sm:$0xff]
    %v27 = vld [vmem:[%s0 + $0x24] sm:$0xf]
    %v28 = vld [vmem:[%s0 + $0x28] sm:$0xff]
    %v29 = vld [vmem:[%s0 + $0x30] sm:$0xff]
    %v30 = vld [vmem:[%s0 + $0x38] sm:$0xf]
    %v31 = vld [vmem:[%s0 + $0x3c] sm:$0xff]
    %v32 = vld [vmem:[%s0 + $0x44] sm:$0xff]
    %v33 = vld [vmem:[%s0 + $0x4c] sm:$0xf]
    %v34 = vld [vmem:[%s1] sm:$0xf]
    %v35 = vld [vmem:[%s1 + $0x4] sm:$0xf]
    %v36 = vld [vmem:[%s1 + $0x8] sm:$0xf]
    %v37 = vld [vmem:[%s1 + $0xc] sm:$0xf]
    %v38 = vld [vmem:[%s1 + $0x10] sm:$0xf]
    %v39 = vld [vmem:[%s1 + $0x14] sm:$0xf]
    %v40 = vld [vmem:[%s1 + $0x18] sm:$0xf]
    %v41 = vld [vmem:[%s1 + $0x1c] sm:$0xf]
    %v42 = vld [vmem:[%s1 + $0x20] sm:$0xf]
    %v43 = vld [vmem:[%s1 + $0x24] sm:$0xf]
    %v44 = vld [vmem:[%s1 + $0x28] sm:$0xf]
    %v45 = vld [vmem:[%s1 + $0x2c] sm:$0xf]
    %v46 = vld [vmem:[%s1 + $0x30] sm:$0xf]
    %v47 = vld [vmem:[%s1 + $0x34] sm:$0xf]
    %v48 = vld [vmem:[%s1 + $0x38] sm:$0xf]
    %v49 = vld [vmem:[%s1 + $0x3c] sm:$0xf]
    %v50 = vld [vmem:[%s1 + $0x40] sm:$0xf]
    %v51 = vld [vmem:[%s1 + $0x44] sm:$0xf]
    %v52 = vld [vmem:[%s1 + $0x48] sm:$0xf]
    %v53 = vld [vmem:[%s1 + $0x4c] sm:$0xf]
    %v54 = vld [vmem:[%s1 + $0x50] sm:$0xf]
    %v55 = vld [vmem:[%s1 + $0x54] sm:$0xf]
    %v56 = vld [vmem:[%s1 + $0x58] sm:$0xf]
    %v57 = vld [vmem:[%s1 + $0x5c] sm:$0xf]
    %v58 = vld [vmem:[%s1 + $0x60] sm:$0xf]
    %v59 = vld [vmem:[%s1 + $0x64] sm:$0xf]
    %v60 = vld [vmem:[%s1 + $0x68] sm:$0xf]
    %v61 = vld [vmem:[%s1 + $0x6c] sm:$0xf]
    %v62 = vld [vmem:[%s1 + $0x70] sm:$0xf]
    %v63 = vld [vmem:[%s1 + $0x74] sm:$0xf]
    %v64 = vld [vmem:[%s1 + $0x78] sm:$0xf]
    %v65 = vld [vmem:[%s1 + $0x7c] sm:$0xf]
    %v66 = vld [vmem:[%s1 + $0x80] sm:$0xf]
    %v67 = vld [vmem:[%s1 + $0x84] sm:$0xf]
    %v68 = vld [vmem:[%s1 + $0x88] sm:$0xf]
    %v69 = vld [vmem:[%s1 + $0x8c] sm:$0xf]
    %v70 = vld [vmem:[%s1 + $0x90] sm:$0xf]
    %v71 = vld [vmem:[%s1 + $0x94] sm:$0xf]
    %v72 = vld [vmem:[%s1 + $0x98] sm:$0xf]
    %v73 = vld [vmem:[%s1 + $0x9c] sm:$0xf]
    %v74 = vld [vmem:[%s1 + $0xa0] sm:$0xf]
    %v75 = vld [vmem:[%s1 + $0xa4] sm:$0xf]
    %v76 = vld [vmem:[%s1 + $0xa8] sm:$0xf]
    %v77 = vld [vmem:[%s1 + $0xac] sm:$0xf]
    %v78 = vld [vmem:[%s1 + $0xb0] sm:$0xf]
    %v79 = vld [vmem:[%s1 + $0xb4] sm:$0xf]
    %v80 = vld [vmem:[%s1 + $0xb8] sm:$0xf]
    %v81 = vld [vmem:[%s1 + $0xbc] sm:$0xf]
    %v82 = vld [vmem:[%s1 + $0xc0] sm:$0xf]
    %v83 = vld [vmem:[%s1 + $0xc4] sm:$0xf]
    %v84 = vld [vmem:[%s1 + $0xc8] sm:$0xf]
    %v85 = vld [vmem:[%s1 + $0xcc] sm:$0xf]
    %v86 = vld [vmem:[%s1 + $0xd0] sm:$0xf]
    %v87 = vld [vmem:[%s1 + $0xd4] sm:$0xf]
    %v88 = vld [vmem:[%s1 + $0xd8] sm:$0xf]
    %v89 = vld [vmem:[%s1 + $0xdc] sm:$0xf]
    %v90 = vld [vmem:[%s1 + $0xe0] sm:$0xf]
    %v91 = vld [vmem:[%s1 + $0xe4] sm:$0xf]
    %v92 = vld [vmem:[%s1 + $0xe8] sm:$0xf]
    %v93 = vld [vmem:[%s1 + $0xec] sm:$0xf]
    %v94 = vld [vmem:[%s1 + $0xf0] sm:$0xf]
    %v95 = vld [vmem:[%s1 + $0xf4] sm:$0xf]
    %v96 = vld [vmem:[%s1 + $0xf8] sm:$0xf]
    %v97 = vld [vmem:[%s1 + $0xfc] sm:$0xf]
    %v98 = vld [vmem:[%s1 + $0x100] sm:$0xf]
    %v99 = vld [vmem:[%s1 + $0x104] sm:$0xf]
    %v100 = vld [vmem:[%s1 + $0x108] sm:$0xf]
    %v101 = vld [vmem:[%s1 + $0x10c] sm:$0xf]
    %v102 = vld [vmem:[%s1 + $0x110] sm:$0xf]
    %v103 = vld [vmem:[%s1 + $0x114] sm:$0xf]
    %v104 = vld [vmem:[%s1 + $0x118] sm:$0xf]
    %v105 = vld [vmem:[%s1 + $0x11c] sm:$0xf]
    %v118 = vunpack.c.l.b16 %v22
    %v119 = vunpack.c.h.b16 %v22
    %v120 = vunpack.c.l.b16 %v23
    %v121 = vunpack.c.h.b16 %v23
    %v122 = vunpack.c.l.b16 %v24
    %v123 = vunpack.c.l.b16 %v25
    %v124 = vunpack.c.h.b16 %v25
    %v125 = vunpack.c.l.b16 %v26
    %v126 = vunpack.c.h.b16 %v26
    %v127 = vunpack.c.l.b16 %v27
    %v128 = vunpack.c.l.b16 %v28
    %v129 = vunpack.c.h.b16 %v28
    %v130 = vunpack.c.l.b16 %v29
    %v131 = vunpack.c.h.b16 %v29
    %v132 = vunpack.c.l.b16 %v30
    %v133 = vunpack.c.l.b16 %v31
    %v134 = vunpack.c.h.b16 %v31
    %v135 = vunpack.c.l.b16 %v32
    %v136 = vunpack.c.h.b16 %v32
    %v137 = vunpack.c.l.b16 %v33
    %v138 = vpack.c.b16 %v123, %v118
    %v139 = vpack.c.b16 %v124, %v119
    %v140 = vpack.c.b16 %v125, %v120
    %v141 = vpack.c.b16 %v126, %v121
    %v142 = vpack.c.b16 %v127, %v122
    %v143 = vpack.c.b16 %v133, %v128
    %v144 = vpack.c.b16 %v134, %v129
    %v145 = vpack.c.b16 %v135, %v130
    %v146 = vpack.c.b16 %v136, %v131
    %v147 = vpack.c.b16 %v137, %v132
    %v228 = vunpack.c.l.b16 %v34
    %v229 = vunpack.c.l.b16 %v35
    %v230 = vunpack.c.l.b16 %v36
    %v231 = vunpack.c.l.b16 %v37
    %v232 = vunpack.c.l.b16 %v38
    %v233 = vunpack.c.l.b16 %v39
    %v234 = vunpack.c.l.b16 %v40
    %v235 = vunpack.c.l.b16 %v41
    %v236 = vunpack.c.l.b16 %v42
    %v237 = vunpack.c.l.b16 %v43
    %v238 = vunpack.c.l.b16 %v44
    %v239 = vunpack.c.l.b16 %v45
    %v240 = vunpack.c.l.b16 %v46
    %v241 = vunpack.c.l.b16 %v47
    %v242 = vunpack.c.l.b16 %v48
    %v243 = vunpack.c.l.b16 %v49
    %v244 = vunpack.c.l.b16 %v50
    %v245 = vunpack.c.l.b16 %v51
    %v246 = vunpack.c.l.b16 %v52
    %v247 = vunpack.c.l.b16 %v53
    %v248 = vunpack.c.l.b16 %v54
    %v249 = vunpack.c.l.b16 %v55
    %v250 = vunpack.c.l.b16 %v56
    %v251 = vunpack.c.l.b16 %v57
    %v252 = vunpack.c.l.b16 %v58
    %v253 = vunpack.c.l.b16 %v59
    %v254 = vunpack.c.l.b16 %v60
    %v255 = vunpack.c.l.b16 %v61
    %v256 = vunpack.c.l.b16 %v62
    %v257 = vunpack.c.l.b16 %v63
    %v258 = vunpack.c.l.b16 %v64
    %v259 = vunpack.c.l.b16 %v65
    %v260 = vunpack.c.l.b16 %v66
    %v261 = vunpack.c.l.b16 %v67
    %v262 = vunpack.c.l.b16 %v68
    %v263 = vunpack.c.l.b16 %v69
    %v264 = vunpack.c.l.b16 %v70
    %v265 = vunpack.c.l.b16 %v71
    %v266 = vunpack.c.l.b16 %v72
    %v267 = vunpack.c.l.b16 %v73
    %v268 = vunpack.c.l.b16 %v74
    %v269 = vunpack.c.l.b16 %v75
    %v270 = vunpack.c.l.b16 %v76
    %v271 = vunpack.c.l.b16 %v77
    %v272 = vunpack.c.l.b16 %v78
    %v273 = vunpack.c.l.b16 %v79
    %v274 = vunpack.c.l.b16 %v80
    %v275 = vunpack.c.l.b16 %v81
    %v276 = vunpack.c.l.b16 %v82
    %v277 = vunpack.c.l.b16 %v83
    %v278 = vunpack.c.l.b16 %v84
    %v279 = vunpack.c.l.b16 %v85
    %v280 = vunpack.c.l.b16 %v86
    %v281 = vunpack.c.l.b16 %v87
    %v282 = vunpack.c.l.b16 %v88
    %v283 = vunpack.c.l.b16 %v89
    %v284 = vunpack.c.l.b16 %v90
    %v285 = vunpack.c.l.b16 %v91
    %v286 = vunpack.c.l.b16 %v92
    %v287 = vunpack.c.l.b16 %v93
    %v288 = vunpack.c.l.b16 %v94
    %v289 = vunpack.c.l.b16 %v95
    %v290 = vunpack.c.l.b16 %v96
    %v291 = vunpack.c.l.b16 %v97
    %v292 = vunpack.c.l.b16 %v98
    %v293 = vunpack.c.l.b16 %v99
    %v294 = vunpack.c.l.b16 %v100
    %v295 = vunpack.c.l.b16 %v101
    %v296 = vunpack.c.l.b16 %v102
    %v297 = vunpack.c.l.b16 %v103
    %v298 = vunpack.c.l.b16 %v104
    %v299 = vunpack.c.l.b16 %v105
    %v300 = vpack.c.b16 %v229, %v228
    %v301 = vpack.c.b16 %v231, %v230
    %v302 = vpack.c.b16 %v233, %v232
    %v303 = vpack.c.b16 %v235, %v234
    %v304 = vpack.c.b16 %v237, %v236
    %v305 = vpack.c.b16 %v239, %v238
    %v306 = vpack.c.b16 %v241, %v240
    %v307 = vpack.c.b16 %v243, %v242
    %v308 = vpack.c.b16 %v245, %v244
    %v309 = vpack.c.b16 %v247, %v246
    %v310 = vpack.c.b16 %v249, %v248
    %v311 = vpack.c.b16 %v251, %v250
    %v312 = vpack.c.b16 %v253, %v252
    %v313 = vpack.c.b16 %v255, %v254
    %v314 = vpack.c.b16 %v257, %v256
    %v315 = vpack.c.b16 %v259, %v258
    %v316 = vpack.c.b16 %v261, %v260
    %v317 = vpack.c.b16 %v263, %v262
    %v318 = vpack.c.b16 %v265, %v264
    %v319 = vpack.c.b16 %v267, %v266
    %v320 = vpack.c.b16 %v269, %v268
    %v321 = vpack.c.b16 %v271, %v270
    %v322 = vpack.c.b16 %v273, %v272
    %v323 = vpack.c.b16 %v275, %v274
    %v324 = vpack.c.b16 %v277, %v276
    %v325 = vpack.c.b16 %v279, %v278
    %v326 = vpack.c.b16 %v281, %v280
    %v327 = vpack.c.b16 %v283, %v282
    %v328 = vpack.c.b16 %v285, %v284
    %v329 = vpack.c.b16 %v287, %v286
    %v330 = vpack.c.b16 %v289, %v288
    %v331 = vpack.c.b16 %v291, %v290
    %v332 = vpack.c.b16 %v293, %v292
    %v333 = vpack.c.b16 %v295, %v294
    %v334 = vpack.c.b16 %v297, %v296
    %v335 = vpack.c.b16 %v299, %v298
    %vm372 = vcmask 523264
    %v374 = vsel %vm372, %v142, 0
    %v377 = vsel %vm372, %v147, 0
    %379 = vmatprep.subr.bf16.mxu0 0
    %380 = vmatpush1.bf16.msra.mxu0 %v307
    %381 = vmatprep.subr.bf16.mxu0 0
    %382 = vmatpush1.bf16.msra.mxu0 %v306
    %383 = vmatprep.subr.bf16.mxu0 0
    %384 = vmatpush1.bf16.msra.mxu0 %v305
    %385 = vmatprep.subr.bf16.mxu0 0
    %386 = vmatpush1.bf16.msra.mxu0 %v304
    %387 = vmatprep.subr.bf16.mxu0 0
    %388 = vmatpush1.bf16.msra.mxu0 %v303
    %389 = vmatprep.subr.bf16.mxu0 0
    %390 = vmatpush1.bf16.msra.mxu0 %v302
    %391 = vmatprep.subr.bf16.mxu0 0
    %392 = vmatpush1.bf16.msra.mxu0 %v301
    %393 = vmatprep.subr.bf16.mxu0 0
    %394 = vmatpush1.bf16.msra.mxu0 %v300
    %395 = vmatprep.subr.bf16.mxu0 0
    %396 = vmatpush2.bf16.msra.mxu0 %v315
    %397 = vmatprep.subr.bf16.mxu0 0
    %398 = vmatpush2.bf16.msra.mxu0 %v314
    %399 = vmatprep.subr.bf16.mxu0 0
    %400 = vmatpush2.bf16.msra.mxu0 %v313
    %401 = vmatprep.subr.bf16.mxu0 0
    %402 = vmatpush2.bf16.msra.mxu0 %v312
    %403 = vmatprep.subr.bf16.mxu0 0
    %404 = vmatpush2.bf16.msra.mxu0 %v311
    %405 = vmatprep.subr.bf16.mxu0 0
    %406 = vmatpush2.bf16.msra.mxu0 %v310
    %407 = vmatprep.subr.bf16.mxu0 0
    %408 = vmatpush2.bf16.msra.mxu0 %v309
    %409 = vmatprep.subr.bf16.mxu0 0
    %410 = vmatpush2.bf16.msra.mxu0 %v308
    %411 = vmatprep.mubr.bf16.mxu0 %v139
    %412 = vmatmul.mubr.bf16.gmra.mxu0 %v138
    %v413 = vpop.f32.mrf.mxu0
    %v414 = vadd.f32 0.0, %v413
    %v415 = vpop.f32.mrf.mxu0
    %v416 = vpop.f32.mrf.mxu0
    %v417 = vadd.f32 0.0, %v416
    %v418 = vpop.f32.mrf.mxu0
    %419 = vmatprep.mubr.bf16.mxu0 %v144
    %420 = vmatmul.mubr.bf16.gmra.mxu0 %v143
    %v421 = vpop.f32.mrf.mxu0
    %v422 = vadd.f32 0.0, %v421
    %v423 = vpop.f32.mrf.mxu0
    %v424 = vpop.f32.mrf.mxu0
    %v425 = vadd.f32 0.0, %v424
    %v426 = vpop.f32.mrf.mxu0
    %427 = vdwg.mxu0
    %428 = vmatprep.subr.bf16.mxu0 0
    %429 = vmatpush1.bf16.msra.mxu0 %v323
    %430 = vmatprep.subr.bf16.mxu0 0
    %431 = vmatpush1.bf16.msra.mxu0 %v322
    %432 = vmatprep.subr.bf16.mxu0 0
    %433 = vmatpush1.bf16.msra.mxu0 %v321
    %434 = vmatprep.subr.bf16.mxu0 0
    %435 = vmatpush1.bf16.msra.mxu0 %v320
    %436 = vmatprep.subr.bf16.mxu0 0
    %437 = vmatpush1.bf16.msra.mxu0 %v319
    %438 = vmatprep.subr.bf16.mxu0 0
    %439 = vmatpush1.bf16.msra.mxu0 %v318
    %440 = vmatprep.subr.bf16.mxu0 0
    %441 = vmatpush1.bf16.msra.mxu0 %v317
    %442 = vmatprep.subr.bf16.mxu0 0
    %443 = vmatpush1.bf16.msra.mxu0 %v316
    %444 = vmatprep.subr.bf16.mxu0 0
    %445 = vmatpush2.bf16.msra.mxu0 %v331
    %446 = vmatprep.subr.bf16.mxu0 0
    %447 = vmatpush2.bf16.msra.mxu0 %v330
    %448 = vmatprep.subr.bf16.mxu0 0
    %449 = vmatpush2.bf16.msra.mxu0 %v329
    %450 = vmatprep.subr.bf16.mxu0 0
    %451 = vmatpush2.bf16.msra.mxu0 %v328
    %452 = vmatprep.subr.bf16.mxu0 0
    %453 = vmatpush2.bf16.msra.mxu0 %v327
    %454 = vmatprep.subr.bf16.mxu0 0
    %455 = vmatpush2.bf16.msra.mxu0 %v326
    %456 = vmatprep.subr.bf16.mxu0 0
    %457 = vmatpush2.bf16.msra.mxu0 %v325
    %458 = vmatprep.subr.bf16.mxu0 0
    %459 = vmatpush2.bf16.msra.mxu0 %v324
    %460 = vmatprep.mubr.bf16.mxu0 %v141
    %461 = vmatmul.mubr.bf16.gmra.mxu0 %v140
    %v462 = vpop.f32.mrf.mxu0
    %v463 = vadd.f32 %v414, %v462
    %v464 = vpop.f32.mrf.mxu0
    %v465 = vpop.f32.mrf.mxu0
    %v466 = vadd.f32 %v417, %v465
    %v467 = vpop.f32.mrf.mxu0
    %468 = vmatprep.mubr.bf16.mxu0 %v146
    %469 = vmatmul.mubr.bf16.gmra.mxu0 %v145
    %v470 = vpop.f32.mrf.mxu0
    %v471 = vadd.f32 %v422, %v470
    %v472 = vpop.f32.mrf.mxu0
    %v473 = vpop.f32.mrf.mxu0
    %v474 = vadd.f32 %v425, %v473
    %v475 = vpop.f32.mrf.mxu0
    %476 = vdwg.mxu0
    %477 = vmatprep.subr.bf16.mxu0 0
    %478 = vmatpush1.bf16.msra.mxu0 0
    %479 = vmatprep.subr.bf16.mxu0 0
    %480 = vmatpush1.bf16.msra.mxu0 0
    %481 = vmatprep.subr.bf16.mxu0 0
    %482 = vmatpush1.bf16.msra.mxu0 0
    %483 = vmatprep.subr.bf16.mxu0 0
    %484 = vmatpush1.bf16.msra.mxu0 0
    %485 = vmatprep.subr.bf16.mxu0 0
    %486 = vmatpush1.bf16.msra.mxu0 %v335
    %487 = vmatprep.subr.bf16.mxu0 0
    %488 = vmatpush1.bf16.msra.mxu0 %v334
    %489 = vmatprep.subr.bf16.mxu0 0
    %490 = vmatpush1.bf16.msra.mxu0 %v333
    %491 = vmatprep.subr.bf16.mxu0 0
    %492 = vmatpush1.bf16.msra.mxu0 %v332
    %493 = vmatprep.subr.bf16.mxu0 0
    %494 = vmatpush2.bf16.msra.mxu0 0
    %495 = vmatprep.subr.bf16.mxu0 0
    %496 = vmatpush2.bf16.msra.mxu0 0
    %497 = vmatprep.subr.bf16.mxu0 0
    %498 = vmatpush2.bf16.msra.mxu0 0
    %499 = vmatprep.subr.bf16.mxu0 0
    %500 = vmatpush2.bf16.msra.mxu0 0
    %501 = vmatprep.subr.bf16.mxu0 0
    %502 = vmatpush2.bf16.msra.mxu0 0
    %503 = vmatprep.subr.bf16.mxu0 0
    %504 = vmatpush2.bf16.msra.mxu0 0
    %505 = vmatprep.subr.bf16.mxu0 0
    %506 = vmatpush2.bf16.msra.mxu0 0
    %507 = vmatprep.subr.bf16.mxu0 0
    %508 = vmatpush2.bf16.msra.mxu0 0
    %509 = vmatprep.mubr.bf16.mxu0 0
    %510 = vmatmul.mubr.bf16.gmra.mxu0 %v374
    %v511 = vpop.f32.mrf.mxu0
    %v512 = vadd.f32 %v463, %v511
    %v513 = vpop.f32.mrf.mxu0
    %v514 = vpop.f32.mrf.mxu0
    %v515 = vadd.f32 %v466, %v514
    %v516 = vpop.f32.mrf.mxu0
    %517 = vmatprep.mubr.bf16.mxu0 0
    %518 = vmatmul.mubr.bf16.gmra.mxu0 %v377
    %v519 = vpop.f32.mrf.mxu0
    %v520 = vadd.f32 %v471, %v519
    %v521 = vpop.f32.mrf.mxu0
    %v522 = vpop.f32.mrf.mxu0
    %v523 = vadd.f32 %v474, %v522
    %v524 = vpop.f32.mrf.mxu0
    %525 = vdwg.mxu0
    %v526 = vld [vmem:[%s2] sm:$0x1]
    %v528 = vlaneseq
    %v529 = vshrl.u32 %v528, 7
    %v530 = vsub.s32 0, %v529
    %v531 = vrot.slane %v526, %v530
    %v533 = vmul.f32 %v512, %v531
    %v534 = vmul.f32 %v515, %v531
    %v535 = vmul.f32 %v520, %v531
    %v536 = vmul.f32 %v523, %v531
    %v537 = vld [vmem:[%s3] sm:$0x1]
    %v539 = vlaneseq
    %v540 = vshrl.u32 %v539, 7
    %v541 = vsub.s32 0, %v540
    %v542 = vrot.slane %v537, %v541
    %v544 = vadd.f32 %v533, %v542
    %v545 = vadd.f32 %v534, %v542
    %v546 = vadd.f32 %v535, %v542
    %v547 = vadd.f32 %v536, %v542
    %v548 = vld [vmem:[%s4] sm:$0xff]
    %v549 = vld [vmem:[%s4 + $0x8] sm:$0xff]
    %v550 = vld [vmem:[%s4 + $0x10] sm:$0xff]
    %v551 = vld [vmem:[%s4 + $0x18] sm:$0xff]
    %v552 = vadd.f32 %v544, %v548
    %v553 = vadd.f32 %v545, %v549
    %v554 = vadd.f32 %v546, %v550
    %v555 = vadd.f32 %v547, %v551
    %v556 = vmax.f32 %v552, 0.0
    %v557 = vmax.f32 %v553, 0.0
    %v558 = vmax.f32 %v554, 0.0
    %v559 = vmax.f32 %v555, 0.0
    %560 = vst.msk [vmem:[#allocation2] sm:$0xff] %vm372, %v556
    %561 = vst.msk [vmem:[#allocation2 + $0x8] sm:$0xff] %vm372, %v557
    %562 = vst.msk [vmem:[#allocation2 + $0x10] sm:$0xff] %vm372, %v558
    %563 = vst.msk [vmem:[#allocation2 + $0x18] sm:$0xff] %vm372, %v559
    // Predicated region
    $region22: #{resnet_encoder_forward.11} parent=1 // pred_check
      _
    $region23: #{resnet_encoder_forward.11} parent=1 // pred_check_branch
      %565 = sbr.rel (0) target = $region25
    $region24: #{resnet_encoder_forward.11} parent=1 // pred_region
      %s567 = ssub.s32 512, 512
      %568 = vsyncadd [#allocation3], %s567
      %s569 = sshll.u32 [#allocation2], 4
      %s570 = int_to_ptr.vmem [resolvable:$true] %s569
      %575 = dma.vmem_to_hbm [thread:$0]  %s570, 512, %s5, [#allocation3], 128, 128, 8
    $region25: #{resnet_encoder_forward.11} parent=1 // pred_fallthru
      _
    // Predicated region
    $region26: #{resnet_encoder_forward.11} parent=1 // pred_check
      _
    $region27: #{resnet_encoder_forward.11} parent=1 // pred_check_branch
      %577 = sbr.rel (0) target = $region29
    $region28: #{resnet_encoder_forward.11} parent=1 // pred_region
      %578 = dma.done [#allocation3], 512
    $region29: #{resnet_encoder_forward.11} parent=1 // pred_fallthru
      _
    %579 = vsyncpa [#allocation3], 1

</llo_original>
